<compile_context>
chip_gen: v7x
topology: tpu7x:2x2x1
jax: 0.10.0
libtpu: 0.0.40
codegen_flags: <defaults>
</compile_context>

<pallas_src>
import jax
import jax.numpy as jnp
from jax.experimental import pallas as pl
from jax.experimental.pallas import tpu as pltpu

N_BAGS = 2                    # independent bags (== independent forward() calls)
N_PATCHES = 8                 # n patches per bag (input1.shape[1])
C_IN, H_IN, W_IN = 4, 8, 8    # per-patch image
CHW = C_IN * H_IN * W_IN      # 256
FEAT = 32                     # num_enmedding_features (synthetic encoder output dim)
H1, H2 = 512, 256             # CLAM size_dict['small'][1:], hardcoded in CLAM_SB
N_CLASSES = 2
K_SAMPLE = 4
WBIG = 640                    # 2*H2 + 2*N_CLASSES = 516, padded to lane multiple
OUT_W = 128                   # lane-dense packed output width


def make_clam_kernel(bags_per_tile):
    rows = bags_per_tile * N_PATCHES

    def clam_kernel(x_ref, wf_ref, wbig_ref, misc_ref, out_ref):
        # misc layout (f32): row0 = b1, row1 = [ba | bb], row2[:H2] = wc,
        #                    row3[0:2]=bcls, row3[2:4]=bic, row3[4]=bc
        b1 = misc_ref[0:1, :]                          # (1, H1)
        ba = misc_ref[1:2, 0:H2]                       # (1, H2)
        bb = misc_ref[1:2, H2:2 * H2]                  # (1, H2)
        wc = misc_ref[2:3, 0:H2]                       # (1, H2)
        bcls_bic = misc_ref[3:4, 0:2 * N_CLASSES]      # (1, 4)
        bc = misc_ref[3:4, 2 * N_CLASSES:2 * N_CLASSES + 1]  # (1, 1)

        # encoder (linear) folded into fc:  h = relu(x @ (We @ W1) + b1)
        x = x_ref[...]                                                        # (rows, CHW) bf16
        h = jnp.dot(x, wf_ref[...], preferred_element_type=jnp.float32) + b1  # (rows, H1) f32
        h = jnp.maximum(h, 0.0)

        # single MXU pass: [wa | wb | wcls | wic]  ->  (rows, WBIG)
        z = jnp.dot(h.astype(wbig_ref.dtype), wbig_ref[...],
                    preferred_element_type=jnp.float32)

        # Attn_Net_Gated: a = tanh(hWa+ba), b = sigmoid(hWb+bb), scores = (a*b)Wc + bc
        a = jnp.tanh(z[:, 0:H2] + ba)
        g = a * jax.nn.sigmoid(z[:, H2:2 * H2] + bb)                          # (rows, H2)
        scores = jnp.sum(g * wc, axis=-1, keepdims=True) + bc                 # (rows, 1)

        # fused classifiers: hw = h @ [wcls | wic] + [bcls | bic]
        hw = z[:, 2 * H2:2 * H2 + 2 * N_CLASSES] + bcls_bic                   # (rows, 4)
        cls_proj = hw[:, 0:N_CLASSES]                                         # (rows, C)  bag branch
        inst = hw[:, N_CLASSES:2 * N_CLASSES]                                 # (rows, C)  instance logits

        # per-bag DiagonalSoftmax over the N_PATCHES rows of each bag, then
        # bag_forward: (attn^T h) Wcls + bcls == sum_i attn_i * (h_i Wcls + bcls).
        # Short unrolled loop over static slices (bags_per_tile is tiny).
        bag_rows = []
        for bg in range(bags_per_tile):
            lo = bg * N_PATCHES
            sc = scores[lo:lo + N_PATCHES, :]                                 # (N, 1)
            e = jnp.exp(sc - jnp.max(sc, axis=0, keepdims=True))
            attn = e / jnp.sum(e, axis=0, keepdims=True)                      # (N, 1)
            bag = jnp.sum(attn * cls_proj[lo:lo + N_PATCHES, :],
                          axis=0, keepdims=True)                              # (1, C)
            bag_rows.append(jnp.broadcast_to(bag, (N_PATCHES, N_CLASSES)))
        bag_b = jnp.concatenate(bag_rows, axis=0)                             # (rows, C)

        # one lane-dense full-vreg store: cols 0:2 inst, col 2 raw scores, cols 3:5 bag
        pad = jnp.zeros((rows, OUT_W - (2 * N_CLASSES + 1)), jnp.float32)
        out_ref[...] = jnp.concatenate([inst, scores, bag_b, pad], axis=-1)

    return clam_kernel


def clam_forward(input1_bags, fused, bags_per_tile=None):
    """input1_bags: (B, n, C, H, W) — B independent ClamWrapper.forward calls."""
    B = input1_bags.shape[0]
    if bags_per_tile is None:
        bags_per_tile = min(B, 16)                 # >=16 rows per MXU pass when possible
    num_tiles = pl.cdiv(B, bags_per_tile)
    b_pad = num_tiles * bags_per_tile
    rows_per_tile = bags_per_tile * N_PATCHES

    x = input1_bags.reshape(B, N_PATCHES, CHW)
    if b_pad != B:                                 # pad dummy (zero) bags; sliced off below
        x = jnp.concatenate(
            [x, jnp.zeros((b_pad - B, N_PATCHES, CHW), x.dtype)], axis=0)
    x_flat = x.reshape(b_pad * N_PATCHES, CHW).astype(jnp.bfloat16)

    slab = pl.pallas_call(
        make_clam_kernel(bags_per_tile),
        out_shape=jax.ShapeDtypeStruct((b_pad * N_PATCHES, OUT_W), jnp.float32),
        grid=(num_tiles,),
        in_specs=[
            pl.BlockSpec((rows_per_tile, CHW), lambda t: (t, 0)),
            pl.BlockSpec((CHW, H1), lambda t: (0, 0)),     # weights: VMEM-resident
            pl.BlockSpec((H1, WBIG), lambda t: (0, 0)),
            pl.BlockSpec((4, H1), lambda t: (0, 0)),
        ],
        out_specs=pl.BlockSpec((rows_per_tile, OUT_W), lambda t: (t, 0)),
        compiler_params=pltpu.CompilerParams(
            dimension_semantics=("parallel",)),            # v7x: shard bag-tiles on 2 TCs
    )(x_flat, fused['wf'], fused['wbig'], fused['misc'])

    slab = slab.reshape(b_pad, N_PATCHES, OUT_W)[:B]
    inst_logit = slab[:, :, 0:N_CLASSES]                                  # (B, N, C)
    scores = slab[:, :, N_CLASSES]                                        # (B, N) raw scores
    bag_logit = slab[:, 0, N_CLASSES + 1:2 * N_CLASSES + 1]               # (B, C)

    # get_topk_ids: softmax is monotone, so top-k of raw scores == top-k of
    # DiagonalSoftmax(A_raw).sum(-1).
    # TODO(synk): top-k index selection done in plain JAX (lax.top_k); no clean Pallas TPU sort/top-k primitive.
    top_p_ids = jax.lax.top_k(scores, K_SAMPLE)[1]
    top_n_ids = jax.lax.top_k(-scores, K_SAMPLE)[1]
    return bag_logit, inst_logit, top_p_ids, top_n_ids


def _xavier_normal(key, fan_in, fan_out):
    std = (2.0 / (fan_in + fan_out)) ** 0.5
    return std * jax.random.normal(key, (fan_in, fan_out), jnp.float32)


def init_params(key):
    """Raw parameters mirroring the PyTorch module (xavier_normal weights, zero biases)."""
    ks = jax.random.split(key, 7)
    return dict(
        we=_xavier_normal(ks[0], CHW, FEAT),   # synthetic encoder: flatten + linear
        w1=_xavier_normal(ks[1], FEAT, H1), b1=jnp.zeros((H1,), jnp.float32),
        wa=_xavier_normal(ks[2], H1, H2), ba=jnp.zeros((H2,), jnp.float32),
        wb=_xavier_normal(ks[3], H1, H2), bb=jnp.zeros((H2,), jnp.float32),
        wc=_xavier_normal(ks[4], H2, 1).reshape(H2), bc=jnp.zeros((), jnp.float32),
        wcls=_xavier_normal(ks[5], H1, N_CLASSES), bcls=jnp.zeros((N_CLASSES,), jnp.float32),
        wic=_xavier_normal(ks[6], H1, N_CLASSES), bic=jnp.zeros((N_CLASSES,), jnp.float32),
    )


def fuse_params(p):
    """Host-side algebraic fusion of the linear layers + bias/weight packing."""
    # encoder folded into fc
    wf = (p['we'] @ p['w1']).astype(jnp.bfloat16)                         # (CHW, H1)
    # big fused projection [wa | wb | wcls | wic], zero-padded to WBIG lanes
    wbig = jnp.zeros((H1, WBIG), jnp.float32)
    wbig = wbig.at[:, 0:H2].set(p['wa'])
    wbig = wbig.at[:, H2:2 * H2].set(p['wb'])
    wbig = wbig.at[:, 2 * H2:2 * H2 + N_CLASSES].set(p['wcls'])
    wbig = wbig.at[:, 2 * H2 + N_CLASSES:2 * H2 + 2 * N_CLASSES].set(p['wic'])
    wbig = wbig.astype(jnp.bfloat16)
    # all small f32 tensors packed into one (4, H1) buffer
    misc = jnp.zeros((4, H1), jnp.float32)
    misc = misc.at[0, :].set(p['b1'])
    misc = misc.at[1, 0:H2].set(p['ba'])
    misc = misc.at[1, H2:2 * H2].set(p['bb'])
    misc = misc.at[2, 0:H2].set(p['wc'])
    misc = misc.at[3, 0:N_CLASSES].set(p['bcls'])
    misc = misc.at[3, N_CLASSES:2 * N_CLASSES].set(p['bic'])
    misc = misc.at[3, 2 * N_CLASSES].set(p['bc'])
    return dict(wf=wf, wbig=wbig, misc=misc)


if __name__ == "__main__":
    key = jax.random.PRNGKey(0)
    pkey, xkey = jax.random.split(key)
    fused = fuse_params(init_params(pkey))

    # Each bag corresponds to one ClamWrapper.forward(input1) with
    # input1 of shape (1, n, C, H, W); N_BAGS bags are batched over the grid.
    input1_bags = jax.random.normal(
        xkey, (N_BAGS, N_PATCHES, C_IN, H_IN, W_IN), jnp.float32)

    bag_logit, inst_logit, top_p_ids, top_n_ids = clam_forward(input1_bags, fused)
    jax.block_until_ready((bag_logit, inst_logit, top_p_ids, top_n_ids))

    assert bag_logit.shape == (N_BAGS, N_CLASSES)
    assert inst_logit.shape == (N_BAGS, N_PATCHES, N_CLASSES)
    assert top_p_ids.shape == (N_BAGS, K_SAMPLE)
    assert top_n_ids.shape == (N_BAGS, K_SAMPLE)
    assert bool(jnp.all(jnp.isfinite(bag_logit))) and bool(jnp.all(jnp.isfinite(inst_logit)))
    print("KERNEL_OK")
</pallas_src>

<mosaic_0001>
module attributes {stable_mosaic.version = 11 : i64} {
  func.func @clam_kernel(%arg0: i32, %arg1: memref<16x256xbf16, #tpu.memory_space<vmem>>, %arg2: memref<256x512xbf16, #tpu.memory_space<vmem>>, %arg3: memref<512x640xbf16, #tpu.memory_space<vmem>>, %arg4: memref<4x512xf32, #tpu.memory_space<vmem>>, %arg5: memref<16x128xf32, #tpu.memory_space<vmem>>) attributes {dimension_semantics = [#tpu.dimension_semantics<parallel>], iteration_bounds = array<i64: 1>, scalar_prefetch = 0 : i64, scratch_operands = 0 : i64, tpu.core_type = #tpu.core_type<tc>, window_params = [{transform_indices = @transform_0, window_bounds = array<i64: 16, 256>}, {pipeline_mode = #tpu.pipeline_mode<synchronous>, transform_indices = @transform_1, window_bounds = array<i64: 256, 512>}, {pipeline_mode = #tpu.pipeline_mode<synchronous>, transform_indices = @transform_2, window_bounds = array<i64: 512, 640>}, {pipeline_mode = #tpu.pipeline_mode<synchronous>, transform_indices = @transform_3, window_bounds = array<i64: 4, 512>}, {transform_indices = @transform_4, window_bounds = array<i64: 16, 128>}]} {
    %c0 = arith.constant 0 : index
    %c0_0 = arith.constant 0 : index
    %0 = vector.load %arg4[%c0, %c0_0] : memref<4x512xf32, #tpu.memory_space<vmem>>, vector<1x512xf32>
    %c1 = arith.constant 1 : index
    %c0_1 = arith.constant 0 : index
    %1 = vector.load %arg4[%c1, %c0_1] : memref<4x512xf32, #tpu.memory_space<vmem>>, vector<1x256xf32>
    %c1_2 = arith.constant 1 : index
    %c256 = arith.constant 256 : index
    %2 = vector.load %arg4[%c1_2, %c256] : memref<4x512xf32, #tpu.memory_space<vmem>>, vector<1x256xf32>
    %c2 = arith.constant 2 : index
    %c0_3 = arith.constant 0 : index
    %3 = vector.load %arg4[%c2, %c0_3] : memref<4x512xf32, #tpu.memory_space<vmem>>, vector<1x256xf32>
    %c3 = arith.constant 3 : index
    %c0_4 = arith.constant 0 : index
    %4 = vector.load %arg4[%c3, %c0_4] : memref<4x512xf32, #tpu.memory_space<vmem>>, vector<1x4xf32>
    %c3_5 = arith.constant 3 : index
    %c4 = arith.constant 4 : index
    %5 = vector.load %arg4[%c3_5, %c4] : memref<4x512xf32, #tpu.memory_space<vmem>>, vector<1x1xf32>
    %c0_6 = arith.constant 0 : index
    %c0_7 = arith.constant 0 : index
    %6 = vector.load %arg1[%c0_6, %c0_7] : memref<16x256xbf16, #tpu.memory_space<vmem>>, vector<16x256xbf16>
    %c0_8 = arith.constant 0 : index
    %c0_9 = arith.constant 0 : index
    %7 = vector.load %arg2[%c0_8, %c0_9] : memref<256x512xbf16, #tpu.memory_space<vmem>>, vector<256x512xbf16>
    %cst = arith.constant dense<0.000000e+00> : vector<16x512xf32>
    %8 = tpu.matmul %6, %7, %cst {dimension_numbers = #tpu.dot_dimension_numbers<[1], [0], [0], [1], [0, 0, 1, 1], [], []>} : vector<16x256xbf16>, vector<256x512xbf16>, vector<16x512xf32> -> vector<16x512xf32>
    %9 = vector.broadcast %0 : vector<1x512xf32> to vector<16x512xf32>
    %10 = arith.addf %8, %9 : vector<16x512xf32>
    %cst_10 = arith.constant 0.000000e+00 : f32
    %11 = vector.broadcast %cst_10 : f32 to vector<16x512xf32>
    %12 = arith.maximumf %10, %11 : vector<16x512xf32>
    %13 = arith.truncf %12 : vector<16x512xf32> to vector<16x512xbf16>
    %c0_11 = arith.constant 0 : index
    %c0_12 = arith.constant 0 : index
    %14 = vector.load %arg3[%c0_11, %c0_12] : memref<512x640xbf16, #tpu.memory_space<vmem>>, vector<512x640xbf16>
    %cst_13 = arith.constant dense<0.000000e+00> : vector<16x640xf32>
    %15 = tpu.matmul %13, %14, %cst_13 {dimension_numbers = #tpu.dot_dimension_numbers<[1], [0], [0], [1], [0, 0, 1, 1], [], []>} : vector<16x512xbf16>, vector<512x640xbf16>, vector<16x640xf32> -> vector<16x640xf32>
    %16 = vector.extract_strided_slice %15 {offsets = [0, 0], sizes = [16, 256], strides = [1, 1]} : vector<16x640xf32> to vector<16x256xf32>
    %17 = vector.broadcast %1 : vector<1x256xf32> to vector<16x256xf32>
    %18 = arith.addf %16, %17 : vector<16x256xf32>
    %19 = math.tanh %18 : vector<16x256xf32>
    %20 = vector.extract_strided_slice %15 {offsets = [0, 256], sizes = [16, 256], strides = [1, 1]} : vector<16x640xf32> to vector<16x256xf32>
    %21 = vector.broadcast %2 : vector<1x256xf32> to vector<16x256xf32>
    %22 = arith.addf %20, %21 : vector<16x256xf32>
    %23 = arith.negf %22 : vector<16x256xf32>
    %24 = math.exp %23 : vector<16x256xf32>
    %cst_14 = arith.constant 1.000000e+00 : f32
    %25 = vector.broadcast %cst_14 : f32 to vector<16x256xf32>
    %26 = arith.addf %25, %24 : vector<16x256xf32>
    %27 = arith.divf %25, %26 : vector<16x256xf32>
    %28 = arith.mulf %19, %27 : vector<16x256xf32>
    %29 = vector.broadcast %3 : vector<1x256xf32> to vector<16x256xf32>
    %30 = arith.mulf %28, %29 : vector<16x256xf32>
    %cst_15 = arith.constant dense<0.000000e+00> : vector<16xf32>
    %31 = vector.multi_reduction <add>, %30, %cst_15 [1] : vector<16x256xf32> to vector<16xf32>
    %32 = vector.shape_cast %31 : vector<16xf32> to vector<16x1xf32>
    %33 = vector.broadcast %5 : vector<1x1xf32> to vector<16x1xf32>
    %34 = arith.addf %32, %33 : vector<16x1xf32>
    %35 = vector.extract_strided_slice %15 {offsets = [0, 512], sizes = [16, 4], strides = [1, 1]} : vector<16x640xf32> to vector<16x4xf32>
    %36 = vector.broadcast %4 : vector<1x4xf32> to vector<16x4xf32>
    %37 = arith.addf %35, %36 : vector<16x4xf32>
    %38 = vector.extract_strided_slice %37 {offsets = [0, 0], sizes = [16, 2], strides = [1, 1]} : vector<16x4xf32> to vector<16x2xf32>
    %39 = vector.extract_strided_slice %37 {offsets = [0, 2], sizes = [16, 2], strides = [1, 1]} : vector<16x4xf32> to vector<16x2xf32>
    %40 = vector.extract_strided_slice %34 {offsets = [0, 0], sizes = [8, 1], strides = [1, 1]} : vector<16x1xf32> to vector<8x1xf32>
    %cst_16 = arith.constant dense<0xFF800000> : vector<1xf32>
    %41 = vector.multi_reduction <maximumf>, %40, %cst_16 [0] : vector<8x1xf32> to vector<1xf32>
    %42 = vector.shape_cast %41 : vector<1xf32> to vector<1x1xf32>
    %43 = vector.broadcast %42 : vector<1x1xf32> to vector<8x1xf32>
    %44 = arith.subf %40, %43 : vector<8x1xf32>
    %45 = math.exp %44 : vector<8x1xf32>
    %cst_17 = arith.constant dense<0.000000e+00> : vector<1xf32>
    %46 = vector.multi_reduction <add>, %45, %cst_17 [0] : vector<8x1xf32> to vector<1xf32>
    %47 = vector.shape_cast %46 : vector<1xf32> to vector<1x1xf32>
    %48 = vector.broadcast %47 : vector<1x1xf32> to vector<8x1xf32>
    %49 = arith.divf %45, %48 : vector<8x1xf32>
    %50 = vector.extract_strided_slice %38 {offsets = [0, 0], sizes = [8, 2], strides = [1, 1]} : vector<16x2xf32> to vector<8x2xf32>
    %51 = vector.broadcast %49 : vector<8x1xf32> to vector<8x2xf32>
    %52 = arith.mulf %51, %50 : vector<8x2xf32>
    %cst_18 = arith.constant dense<0.000000e+00> : vector<2xf32>
    %53 = vector.multi_reduction <add>, %52, %cst_18 [0] : vector<8x2xf32> to vector<2xf32>
    %54 = vector.shape_cast %53 : vector<2xf32> to vector<1x2xf32>
    %55 = vector.shape_cast %54 : vector<1x2xf32> to vector<1x2xf32>
    %56 = vector.broadcast %55 : vector<1x2xf32> to vector<8x2xf32>
    %57 = vector.extract_strided_slice %34 {offsets = [8, 0], sizes = [8, 1], strides = [1, 1]} : vector<16x1xf32> to vector<8x1xf32>
    %cst_19 = arith.constant dense<0xFF800000> : vector<1xf32>
    %58 = vector.multi_reduction <maximumf>, %57, %cst_19 [0] : vector<8x1xf32> to vector<1xf32>
    %59 = vector.shape_cast %58 : vector<1xf32> to vector<1x1xf32>
    %60 = vector.broadcast %59 : vector<1x1xf32> to vector<8x1xf32>
    %61 = arith.subf %57, %60 : vector<8x1xf32>
    %62 = math.exp %61 : vector<8x1xf32>
    %cst_20 = arith.constant dense<0.000000e+00> : vector<1xf32>
    %63 = vector.multi_reduction <add>, %62, %cst_20 [0] : vector<8x1xf32> to vector<1xf32>
    %64 = vector.shape_cast %63 : vector<1xf32> to vector<1x1xf32>
    %65 = vector.broadcast %64 : vector<1x1xf32> to vector<8x1xf32>
    %66 = arith.divf %62, %65 : vector<8x1xf32>
    %67 = vector.extract_strided_slice %38 {offsets = [8, 0], sizes = [8, 2], strides = [1, 1]} : vector<16x2xf32> to vector<8x2xf32>
    %68 = vector.broadcast %66 : vector<8x1xf32> to vector<8x2xf32>
    %69 = arith.mulf %68, %67 : vector<8x2xf32>
    %cst_21 = arith.constant dense<0.000000e+00> : vector<2xf32>
    %70 = vector.multi_reduction <add>, %69, %cst_21 [0] : vector<8x2xf32> to vector<2xf32>
    %71 = vector.shape_cast %70 : vector<2xf32> to vector<1x2xf32>
    %72 = vector.shape_cast %71 : vector<1x2xf32> to vector<1x2xf32>
    %73 = vector.broadcast %72 : vector<1x2xf32> to vector<8x2xf32>
    %74 = tpu.concatenate %56, %73 in 0 : vector<8x2xf32>, vector<8x2xf32> -> vector<16x2xf32>
    %cst_22 = arith.constant 0.000000e+00 : f32
    %75 = vector.broadcast %cst_22 : f32 to vector<16x123xf32>
    %76 = tpu.concatenate %39, %34, %74, %75 in 1 : vector<16x2xf32>, vector<16x1xf32>, vector<16x2xf32>, vector<16x123xf32> -> vector<16x128xf32>
    %c0_23 = arith.constant 0 : index
    %c0_24 = arith.constant 0 : index
    %77 = vector.load %arg5[%c0_23, %c0_24] : memref<16x128xf32, #tpu.memory_space<vmem>>, vector<16x128xf32>
    tpu.vector_store %arg5[%c0_23, %c0_24], %76 {strides = array<i32>} : memref<16x128xf32, #tpu.memory_space<vmem>>, vector<16x128xf32>,
    return
  }
  func.func @transform_0(%arg0: i32) -> (i32, i32) {
    %c0_i32 = arith.constant 0 : i32
    %c0_i32_0 = arith.constant 0 : i32
    return %arg0, %c0_i32 : i32, i32
  }
  func.func @transform_1(%arg0: i32) -> (i32, i32) {
    %c0_i32 = arith.constant 0 : i32
    %c0_i32_0 = arith.constant 0 : i32
    %c0_i32_1 = arith.constant 0 : i32
    return %c0_i32, %c0_i32_0 : i32, i32
  }
  func.func @transform_2(%arg0: i32) -> (i32, i32) {
    %c0_i32 = arith.constant 0 : i32
    %c0_i32_0 = arith.constant 0 : i32
    %c0_i32_1 = arith.constant 0 : i32
    return %c0_i32, %c0_i32_0 : i32, i32
  }
  func.func @transform_3(%arg0: i32) -> (i32, i32) {
    %c0_i32 = arith.constant 0 : i32
    %c0_i32_0 = arith.constant 0 : i32
    %c0_i32_1 = arith.constant 0 : i32
    return %c0_i32, %c0_i32_0 : i32, i32
  }
  func.func @transform_4(%arg0: i32) -> (i32, i32) {
    %c0_i32 = arith.constant 0 : i32
    %c0_i32_0 = arith.constant 0 : i32
    return %arg0, %c0_i32 : i32, i32
  }
}

</mosaic_0001>

<llo_original>
// kernel: tpu_custom_call.1
$region0: #{tpu_custom_call.1}
  #allocation0 [shape = 'u32[]', space=smem, size = 0x4, offset = 0x4, fixed_abs, tag = 'smem constant byte address 0x4 - core index']
  #allocation1 [shape = 'u32[144,128]{1,0:T(1,128)}', space=vmem, size = 0x12000, scoped, tag = 'internal scratch']
  %s0 = inlined_call_operand.hbm [shape: bf16[16,256], index: 0, kind: input, shape index: {}]
  %s1 = inlined_call_operand.hbm [shape: bf16[256,512], index: 1, kind: input, shape index: {}]
  %s2 = inlined_call_operand.hbm [shape: bf16[512,640], index: 2, kind: input, shape index: {}]
  %s3 = inlined_call_operand.hbm [shape: f32[4,512], index: 3, kind: input, shape index: {}]
  %s4 = inlined_call_operand.hbm [shape: f32[16,128], index: 4, kind: output, shape index: {}]
  %s5 = sld [smem:[#allocation0]]
  $region42: #{tpu_custom_call.1} parent=0
    _
  %s7 = ssub.s32 1, %s5
  %s8 = scalar_select 0, %s7, %s5
  $region1: #{tpu_custom_call.1} parent=0
    #allocation2 [shape = 'u8[8192]{0}', space=vmem, size = 0x2000, scoped, tag = 'input window, operand 0, single buffered']
    #allocation3 [shape = 's32[1]{0}', space=sflag, size = 0x4, scoped, tag = 'scoped memory for tpu_custom_call.1']
    #allocation4 [shape = 's32[1]{0}', space=sflag, size = 0x4, scoped, tag = 'scoped memory for tpu_custom_call.1']
    #allocation5 [shape = 'u8[262144]{0}', space=vmem, size = 0x40000, scoped, tag = 'input window, operand 1, single buffered']
    #allocation6 [shape = 's32[1]{0}', space=sflag, size = 0x4, scoped, tag = 'scoped memory for tpu_custom_call.1']
    #allocation7 [shape = 'u8[655360]{0}', space=vmem, size = 0xa0000, scoped, tag = 'input window, operand 2, single buffered']
    #allocation8 [shape = 'u8[8192]{0}', space=vmem, size = 0x2000, scoped, tag = 'input window, operand 3, single buffered']
    #allocation9 [shape = 's32[1]{0}', space=sflag, size = 0x4, scoped, tag = 'scoped memory for tpu_custom_call.1']
    #allocation10 [shape = 'u8[8192]{0}', space=vmem, size = 0x2000, scoped, tag = 'output window, operand 0, single buffered']
    %9 = vsyncpa [#allocation3], 0
    %10 = vsyncpa [#allocation6], 0
    %11 = vsyncpa [#allocation9], 0
    %12 = vsyncpa [#allocation4], 0
    // Predicated region
    $region2: #{tpu_custom_call.1} parent=1 // pred_check
      _
    $region3: #{tpu_custom_call.1} parent=1 // pred_check_branch
      %14 = sbr.rel (0) target = $region5
    $region4: #{tpu_custom_call.1} parent=1 // pred_region
      %s16 = ssub.s32 256, 256
      %17 = vsyncadd [#allocation3], %s16
      %s18 = sshll.u32 [#allocation2], 4
      %s19 = int_to_ptr.vmem [resolvable:$true] %s18
      %24 = dma.hbm_to_vmem [thread:$0]  %s0, 256, %s19, [#allocation3], 128, 128, 8
    $region5: #{tpu_custom_call.1} parent=1 // pred_fallthru
      _
    // Predicated region
    $region6: #{tpu_custom_call.1} parent=1 // pred_check
      _
    $region7: #{tpu_custom_call.1} parent=1 // pred_check_branch
      %26 = sbr.rel (0) target = $region9
    $region8: #{tpu_custom_call.1} parent=1 // pred_region
      %s28 = ssub.s32 8192, 8192
      %29 = vsyncadd [#allocation6], %s28
      %s30 = sshll.u32 [#allocation5], 4
      %s31 = int_to_ptr.vmem [resolvable:$true] %s30
      %36 = dma.hbm_to_vmem [thread:$0]  %s1, 8192, %s31, [#allocation6], 256, 256, 16
    $region9: #{tpu_custom_call.1} parent=1 // pred_fallthru
      _
    // Predicated region
    $region10: #{tpu_custom_call.1} parent=1 // pred_check
      _
    $region11: #{tpu_custom_call.1} parent=1 // pred_check_branch
      %38 = sbr.rel (0) target = $region13
    $region12: #{tpu_custom_call.1} parent=1 // pred_region
      %s40 = ssub.s32 20480, 20480
      %41 = vsyncadd [#allocation6], %s40
      %s42 = sshll.u32 [#allocation7], 4
      %s43 = int_to_ptr.vmem [resolvable:$true] %s42
      %48 = dma.hbm_to_vmem [thread:$0]  %s2, 20480, %s43, [#allocation6], 320, 320, 20
    $region13: #{tpu_custom_call.1} parent=1 // pred_fallthru
      _
    // Predicated region
    $region14: #{tpu_custom_call.1} parent=1 // pred_check
      _
    $region15: #{tpu_custom_call.1} parent=1 // pred_check_branch
      %50 = sbr.rel (0) target = $region17
    $region16: #{tpu_custom_call.1} parent=1 // pred_region
      %s52 = ssub.s32 256, 256
      %53 = vsyncadd [#allocation9], %s52
      %s55 = sshll.u32 [#allocation8], 4
      %s56 = int_to_ptr.vmem [resolvable:$true] %s55
      %58 = dma.hbm_to_vmem [thread:$0]  %s3, 256, %s56, [#allocation9]
    $region17: #{tpu_custom_call.1} parent=1 // pred_fallthru
      _
    // Predicated region
    $region18: #{tpu_custom_call.1} parent=1 // pred_check
      _
    $region19: #{tpu_custom_call.1} parent=1 // pred_check_branch
      %60 = sbr.rel (0) target = $region21
    $region20: #{tpu_custom_call.1} parent=1 // pred_region
      %61 = dma.done [#allocation3], 256
    $region21: #{tpu_custom_call.1} parent=1 // pred_fallthru
      _
    // Predicated region
    $region22: #{tpu_custom_call.1} parent=1 // pred_check
      _
    $region23: #{tpu_custom_call.1} parent=1 // pred_check_branch
      %63 = sbr.rel (0) target = $region25
    $region24: #{tpu_custom_call.1} parent=1 // pred_region
      %64 = dma.done [#allocation6], 8192
    $region25: #{tpu_custom_call.1} parent=1 // pred_fallthru
      _
    // Predicated region
    $region26: #{tpu_custom_call.1} parent=1 // pred_check
      _
    $region27: #{tpu_custom_call.1} parent=1 // pred_check_branch
      %66 = sbr.rel (0) target = $region29
    $region28: #{tpu_custom_call.1} parent=1 // pred_region
      %67 = dma.done [#allocation6], 20480
    $region29: #{tpu_custom_call.1} parent=1 // pred_fallthru
      _
    // Predicated region
    $region30: #{tpu_custom_call.1} parent=1 // pred_check
      _
    $region31: #{tpu_custom_call.1} parent=1 // pred_check_branch
      %69 = sbr.rel (0) target = $region33
    $region32: #{tpu_custom_call.1} parent=1 // pred_region
      %70 = dma.done [#allocation9], 256
    $region33: #{tpu_custom_call.1} parent=1 // pred_fallthru
      _
    %v72 = vld [vmem:[#allocation8] ss:$4 sm:$0xf]
    %s73 = scalar_lea.vmem [#allocation8], 1
    %v74 = vld [vmem:[%s73] ss:$4 sm:$0x3]
    %s75 = scalar_lea.vmem [#allocation8], 9
    %v76 = vld [vmem:[%s75] ss:$4 sm:$0x3]
    %s77 = scalar_lea.vmem [#allocation8], 2
    %v78 = vld [vmem:[%s77] ss:$4 sm:$0x3]
    %v79 = vld [vmem:[#allocation8 + $0x3] sm:$0x1]
    %v80 = vld [vmem:[#allocation2] sm:$0xff]
    %v81 = vld [vmem:[#allocation2 + $0x8] sm:$0xff]
    %v82 = vld [vmem:[#allocation5] sm:$0xff]
    %v83 = vld [vmem:[#allocation5 + $0x8] sm:$0xff]
    %v84 = vld [vmem:[#allocation5 + $0x10] sm:$0xff]
    %v85 = vld [vmem:[#allocation5 + $0x18] sm:$0xff]
    %v86 = vld [vmem:[#allocation5 + $0x20] sm:$0xff]
    %v87 = vld [vmem:[#allocation5 + $0x28] sm:$0xff]
    %v88 = vld [vmem:[#allocation5 + $0x30] sm:$0xff]
    %v89 = vld [vmem:[#allocation5 + $0x38] sm:$0xff]
    %v90 = vld [vmem:[#allocation5 + $0x40] sm:$0xff]
    %v91 = vld [vmem:[#allocation5 + $0x48] sm:$0xff]
    %v92 = vld [vmem:[#allocation5 + $0x50] sm:$0xff]
    %v93 = vld [vmem:[#allocation5 + $0x58] sm:$0xff]
    %v94 = vld [vmem:[#allocation5 + $0x60] sm:$0xff]
    %v95 = vld [vmem:[#allocation5 + $0x68] sm:$0xff]
    %v96 = vld [vmem:[#allocation5 + $0x70] sm:$0xff]
    %v97 = vld [vmem:[#allocation5 + $0x78] sm:$0xff]
    %v98 = vld [vmem:[#allocation5 + $0x80] sm:$0xff]
    %v99 = vld [vmem:[#allocation5 + $0x88] sm:$0xff]
    %v100 = vld [vmem:[#allocation5 + $0x90] sm:$0xff]
    %v101 = vld [vmem:[#allocation5 + $0x98] sm:$0xff]
    %v102 = vld [vmem:[#allocation5 + $0xa0] sm:$0xff]
    %v103 = vld [vmem:[#allocation5 + $0xa8] sm:$0xff]
    %v104 = vld [vmem:[#allocation5 + $0xb0] sm:$0xff]
    %v105 = vld [vmem:[#allocation5 + $0xb8] sm:$0xff]
    %v106 = vld [vmem:[#allocation5 + $0xc0] sm:$0xff]
    %v107 = vld [vmem:[#allocation5 + $0xc8] sm:$0xff]
    %v108 = vld [vmem:[#allocation5 + $0xd0] sm:$0xff]
    %v109 = vld [vmem:[#allocation5 + $0xd8] sm:$0xff]
    %v110 = vld [vmem:[#allocation5 + $0xe0] sm:$0xff]
    %v111 = vld [vmem:[#allocation5 + $0xe8] sm:$0xff]
    %v112 = vld [vmem:[#allocation5 + $0xf0] sm:$0xff]
    %v113 = vld [vmem:[#allocation5 + $0xf8] sm:$0xff]
    %v114 = vld [vmem:[#allocation5 + $0x100] sm:$0xff]
    %v115 = vld [vmem:[#allocation5 + $0x108] sm:$0xff]
    %v116 = vld [vmem:[#allocation5 + $0x110] sm:$0xff]
    %v117 = vld [vmem:[#allocation5 + $0x118] sm:$0xff]
    %v118 = vld [vmem:[#allocation5 + $0x120] sm:$0xff]
    %v119 = vld [vmem:[#allocation5 + $0x128] sm:$0xff]
    %v120 = vld [vmem:[#allocation5 + $0x130] sm:$0xff]
    %v121 = vld [vmem:[#allocation5 + $0x138] sm:$0xff]
    %v122 = vld [vmem:[#allocation5 + $0x140] sm:$0xff]
    %v123 = vld [vmem:[#allocation5 + $0x148] sm:$0xff]
    %v124 = vld [vmem:[#allocation5 + $0x150] sm:$0xff]
    %v125 = vld [vmem:[#allocation5 + $0x158] sm:$0xff]
    %v126 = vld [vmem:[#allocation5 + $0x160] sm:$0xff]
    %v127 = vld [vmem:[#allocation5 + $0x168] sm:$0xff]
    %v128 = vld [vmem:[#allocation5 + $0x170] sm:$0xff]
    %v129 = vld [vmem:[#allocation5 + $0x178] sm:$0xff]
    %v130 = vld [vmem:[#allocation5 + $0x180] sm:$0xff]
    %v131 = vld [vmem:[#allocation5 + $0x188] sm:$0xff]
    %v132 = vld [vmem:[#allocation5 + $0x190] sm:$0xff]
    %v133 = vld [vmem:[#allocation5 + $0x198] sm:$0xff]
    %v134 = vld [vmem:[#allocation5 + $0x1a0] sm:$0xff]
    %v135 = vld [vmem:[#allocation5 + $0x1a8] sm:$0xff]
    %v136 = vld [vmem:[#allocation5 + $0x1b0] sm:$0xff]
    %v137 = vld [vmem:[#allocation5 + $0x1b8] sm:$0xff]
    %v138 = vld [vmem:[#allocation5 + $0x1c0] sm:$0xff]
    %v139 = vld [vmem:[#allocation5 + $0x1c8] sm:$0xff]
    %v140 = vld [vmem:[#allocation5 + $0x1d0] sm:$0xff]
    %v141 = vld [vmem:[#allocation5 + $0x1d8] sm:$0xff]
    %v142 = vld [vmem:[#allocation5 + $0x1e0] sm:$0xff]
    %v143 = vld [vmem:[#allocation5 + $0x1e8] sm:$0xff]
    %v144 = vld [vmem:[#allocation5 + $0x1f0] sm:$0xff]
    %v145 = vld [vmem:[#allocation5 + $0x1f8] sm:$0xff]
    %v147 = vlaneseq
    %v148 = vshrl.u32 %v147, 7
    %v149 = vsub.s32 0, %v148
    %v150 = vrot.slane %v72, %v149
    %v151 = vlaneseq
    %v152 = vshrl.u32 %v151, 7
    %v153 = vsub.s32 1, %v152
    %v154 = vrot.slane %v72, %v153
    %v155 = vlaneseq
    %v156 = vshrl.u32 %v155, 7
    %v157 = vsub.s32 2, %v156
    %v158 = vrot.slane %v72, %v157
    %v159 = vlaneseq
    %v160 = vshrl.u32 %v159, 7
    %v161 = vsub.s32 3, %v160
    %v162 = vrot.slane %v72, %v161
    %v169 = vunpack.c.l.b16 %v80
    %v170 = vunpack.c.h.b16 %v80
    %v171 = vunpack.c.l.b16 %v81
    %v172 = vunpack.c.h.b16 %v81
    %v173 = vpack.c.b16 %v171, %v169
    %v174 = vpack.c.b16 %v172, %v170
    %v241 = vunpack.c.l.b16 %v82
    %v242 = vunpack.c.h.b16 %v82
    %v243 = vunpack.c.l.b16 %v83
    %v244 = vunpack.c.h.b16 %v83
    %v245 = vunpack.c.l.b16 %v84
    %v246 = vunpack.c.h.b16 %v84
    %v247 = vunpack.c.l.b16 %v85
    %v248 = vunpack.c.h.b16 %v85
    %v249 = vunpack.c.l.b16 %v86
    %v250 = vunpack.c.h.b16 %v86
    %v251 = vunpack.c.l.b16 %v87
    %v252 = vunpack.c.h.b16 %v87
    %v253 = vunpack.c.l.b16 %v88
    %v254 = vunpack.c.h.b16 %v88
    %v255 = vunpack.c.l.b16 %v89
    %v256 = vunpack.c.h.b16 %v89
    %v257 = vunpack.c.l.b16 %v90
    %v258 = vunpack.c.h.b16 %v90
    %v259 = vunpack.c.l.b16 %v91
    %v260 = vunpack.c.h.b16 %v91
    %v261 = vunpack.c.l.b16 %v92
    %v262 = vunpack.c.h.b16 %v92
    %v263 = vunpack.c.l.b16 %v93
    %v264 = vunpack.c.h.b16 %v93
    %v265 = vunpack.c.l.b16 %v94
    %v266 = vunpack.c.h.b16 %v94
    %v267 = vunpack.c.l.b16 %v95
    %v268 = vunpack.c.h.b16 %v95
    %v269 = vunpack.c.l.b16 %v96
    %v270 = vunpack.c.h.b16 %v96
    %v271 = vunpack.c.l.b16 %v97
    %v272 = vunpack.c.h.b16 %v97
    %v273 = vunpack.c.l.b16 %v98
    %v274 = vunpack.c.h.b16 %v98
    %v275 = vunpack.c.l.b16 %v99
    %v276 = vunpack.c.h.b16 %v99
    %v277 = vunpack.c.l.b16 %v100
    %v278 = vunpack.c.h.b16 %v100
    %v279 = vunpack.c.l.b16 %v101
    %v280 = vunpack.c.h.b16 %v101
    %v281 = vunpack.c.l.b16 %v102
    %v282 = vunpack.c.h.b16 %v102
    %v283 = vunpack.c.l.b16 %v103
    %v284 = vunpack.c.h.b16 %v103
    %v285 = vunpack.c.l.b16 %v104
    %v286 = vunpack.c.h.b16 %v104
    %v287 = vunpack.c.l.b16 %v105
    %v288 = vunpack.c.h.b16 %v105
    %v289 = vunpack.c.l.b16 %v106
    %v290 = vunpack.c.h.b16 %v106
    %v291 = vunpack.c.l.b16 %v107
    %v292 = vunpack.c.h.b16 %v107
    %v293 = vunpack.c.l.b16 %v108
    %v294 = vunpack.c.h.b16 %v108
    %v295 = vunpack.c.l.b16 %v109
    %v296 = vunpack.c.h.b16 %v109
    %v297 = vunpack.c.l.b16 %v110
    %v298 = vunpack.c.h.b16 %v110
    %v299 = vunpack.c.l.b16 %v111
    %v300 = vunpack.c.h.b16 %v111
    %v301 = vunpack.c.l.b16 %v112
    %v302 = vunpack.c.h.b16 %v112
    %v303 = vunpack.c.l.b16 %v113
    %v304 = vunpack.c.h.b16 %v113
    %v305 = vunpack.c.l.b16 %v114
    %v306 = vunpack.c.h.b16 %v114
    %v307 = vunpack.c.l.b16 %v115
    %v308 = vunpack.c.h.b16 %v115
    %v309 = vunpack.c.l.b16 %v116
    %v310 = vunpack.c.h.b16 %v116
    %v311 = vunpack.c.l.b16 %v117
    %v312 = vunpack.c.h.b16 %v117
    %v313 = vunpack.c.l.b16 %v118
    %v314 = vunpack.c.h.b16 %v118
    %v315 = vunpack.c.l.b16 %v119
    %v316 = vunpack.c.h.b16 %v119
    %v317 = vunpack.c.l.b16 %v120
    %v318 = vunpack.c.h.b16 %v120
    %v319 = vunpack.c.l.b16 %v121
    %v320 = vunpack.c.h.b16 %v121
    %v321 = vunpack.c.l.b16 %v122
    %v322 = vunpack.c.h.b16 %v122
    %v323 = vunpack.c.l.b16 %v123
    %v324 = vunpack.c.h.b16 %v123
    %v325 = vunpack.c.l.b16 %v124
    %v326 = vunpack.c.h.b16 %v124
    %v327 = vunpack.c.l.b16 %v125
    %v328 = vunpack.c.h.b16 %v125
    %v329 = vunpack.c.l.b16 %v126
    %v330 = vunpack.c.h.b16 %v126
    %v331 = vunpack.c.l.b16 %v127
    %v332 = vunpack.c.h.b16 %v127
    %v333 = vunpack.c.l.b16 %v128
    %v334 = vunpack.c.h.b16 %v128
    %v335 = vunpack.c.l.b16 %v129
    %v336 = vunpack.c.h.b16 %v129
    %v337 = vunpack.c.l.b16 %v130
    %v338 = vunpack.c.h.b16 %v130
    %v339 = vunpack.c.l.b16 %v131
    %v340 = vunpack.c.h.b16 %v131
    %v341 = vunpack.c.l.b16 %v132
    %v342 = vunpack.c.h.b16 %v132
    %v343 = vunpack.c.l.b16 %v133
    %v344 = vunpack.c.h.b16 %v133
    %v345 = vunpack.c.l.b16 %v134
    %v346 = vunpack.c.h.b16 %v134
    %v347 = vunpack.c.l.b16 %v135
    %v348 = vunpack.c.h.b16 %v135
    %v349 = vunpack.c.l.b16 %v136
    %v350 = vunpack.c.h.b16 %v136
    %v351 = vunpack.c.l.b16 %v137
    %v352 = vunpack.c.h.b16 %v137
    %v353 = vunpack.c.l.b16 %v138
    %v354 = vunpack.c.h.b16 %v138
    %v355 = vunpack.c.l.b16 %v139
    %v356 = vunpack.c.h.b16 %v139
    %v357 = vunpack.c.l.b16 %v140
    %v358 = vunpack.c.h.b16 %v140
    %v359 = vunpack.c.l.b16 %v141
    %v360 = vunpack.c.h.b16 %v141
    %v361 = vunpack.c.l.b16 %v142
    %v362 = vunpack.c.h.b16 %v142
    %v363 = vunpack.c.l.b16 %v143
    %v364 = vunpack.c.h.b16 %v143
    %v365 = vunpack.c.l.b16 %v144
    %v366 = vunpack.c.h.b16 %v144
    %v367 = vunpack.c.l.b16 %v145
    %v368 = vunpack.c.h.b16 %v145
    %v369 = vpack.c.b16 %v245, %v241
    %v370 = vpack.c.b16 %v246, %v242
    %v371 = vpack.c.b16 %v247, %v243
    %v372 = vpack.c.b16 %v248, %v244
    %v373 = vpack.c.b16 %v253, %v249
    %v374 = vpack.c.b16 %v254, %v250
    %v375 = vpack.c.b16 %v255, %v251
    %v376 = vpack.c.b16 %v256, %v252
    %v377 = vpack.c.b16 %v261, %v257
    %v378 = vpack.c.b16 %v262, %v258
    %v379 = vpack.c.b16 %v263, %v259
    %v380 = vpack.c.b16 %v264, %v260
    %v381 = vpack.c.b16 %v269, %v265
    %v382 = vpack.c.b16 %v270, %v266
    %v383 = vpack.c.b16 %v271, %v267
    %v384 = vpack.c.b16 %v272, %v268
    %v385 = vpack.c.b16 %v277, %v273
    %v386 = vpack.c.b16 %v278, %v274
    %v387 = vpack.c.b16 %v279, %v275
    %v388 = vpack.c.b16 %v280, %v276
    %v389 = vpack.c.b16 %v285, %v281
    %v390 = vpack.c.b16 %v286, %v282
    %v391 = vpack.c.b16 %v287, %v283
    %v392 = vpack.c.b16 %v288, %v284
    %v393 = vpack.c.b16 %v293, %v289
    %v394 = vpack.c.b16 %v294, %v290
    %v395 = vpack.c.b16 %v295, %v291
    %v396 = vpack.c.b16 %v296, %v292
    %v397 = vpack.c.b16 %v301, %v297
    %v398 = vpack.c.b16 %v302, %v298
    %v399 = vpack.c.b16 %v303, %v299
    %v400 = vpack.c.b16 %v304, %v300
    %v401 = vpack.c.b16 %v309, %v305
    %v402 = vpack.c.b16 %v310, %v306
    %v403 = vpack.c.b16 %v311, %v307
    %v404 = vpack.c.b16 %v312, %v308
    %v405 = vpack.c.b16 %v317, %v313
    %v406 = vpack.c.b16 %v318, %v314
    %v407 = vpack.c.b16 %v319, %v315
    %v408 = vpack.c.b16 %v320, %v316
    %v409 = vpack.c.b16 %v325, %v321
    %v410 = vpack.c.b16 %v326, %v322
    %v411 = vpack.c.b16 %v327, %v323
    %v412 = vpack.c.b16 %v328, %v324
    %v413 = vpack.c.b16 %v333, %v329
    %v414 = vpack.c.b16 %v334, %v330
    %v415 = vpack.c.b16 %v335, %v331
    %v416 = vpack.c.b16 %v336, %v332
    %v417 = vpack.c.b16 %v341, %v337
    %v418 = vpack.c.b16 %v342, %v338
    %v419 = vpack.c.b16 %v343, %v339
    %v420 = vpack.c.b16 %v344, %v340
    %v421 = vpack.c.b16 %v349, %v345
    %v422 = vpack.c.b16 %v350, %v346
    %v423 = vpack.c.b16 %v351, %v347
    %v424 = vpack.c.b16 %v352, %v348
    %v425 = vpack.c.b16 %v357, %v353
    %v426 = vpack.c.b16 %v358, %v354
    %v427 = vpack.c.b16 %v359, %v355
    %v428 = vpack.c.b16 %v360, %v356
    %v429 = vpack.c.b16 %v365, %v361
    %v430 = vpack.c.b16 %v366, %v362
    %v431 = vpack.c.b16 %v367, %v363
    %v432 = vpack.c.b16 %v368, %v364
    %497 = vmatprep.subr.bf16.mxu0 %v370
    %498 = vmatpush1.bf16.msra.mxu0 %v369
    %499 = vmatprep.subr.bf16.mxu0 %v374
    %500 = vmatpush1.bf16.msra.mxu0 %v373
    %501 = vmatprep.subr.bf16.mxu0 %v378
    %502 = vmatpush1.bf16.msra.mxu0 %v377
    %503 = vmatprep.subr.bf16.mxu0 %v382
    %504 = vmatpush1.bf16.msra.mxu0 %v381
    %505 = vmatprep.subr.bf16.mxu0 %v386
    %506 = vmatpush1.bf16.msra.mxu0 %v385
    %507 = vmatprep.subr.bf16.mxu0 %v390
    %508 = vmatpush1.bf16.msra.mxu0 %v389
    %509 = vmatprep.subr.bf16.mxu0 %v394
    %510 = vmatpush1.bf16.msra.mxu0 %v393
    %511 = vmatprep.subr.bf16.mxu0 %v398
    %512 = vmatpush1.bf16.msra.mxu0 %v397
    %513 = vmatprep.subr.bf16.mxu0 %v402
    %514 = vmatpush1.bf16.msra.mxu0 %v401
    %515 = vmatprep.subr.bf16.mxu0 %v406
    %516 = vmatpush1.bf16.msra.mxu0 %v405
    %517 = vmatprep.subr.bf16.mxu0 %v410
    %518 = vmatpush1.bf16.msra.mxu0 %v409
    %519 = vmatprep.subr.bf16.mxu0 %v414
    %520 = vmatpush1.bf16.msra.mxu0 %v413
    %521 = vmatprep.subr.bf16.mxu0 %v418
    %522 = vmatpush1.bf16.msra.mxu0 %v417
    %523 = vmatprep.subr.bf16.mxu0 %v422
    %524 = vmatpush1.bf16.msra.mxu0 %v421
    %525 = vmatprep.subr.bf16.mxu0 %v426
    %526 = vmatpush1.bf16.msra.mxu0 %v425
    %527 = vmatprep.subr.bf16.mxu0 %v430
    %528 = vmatpush1.bf16.msra.mxu0 %v429
    %529 = vmatprep.mubr.bf16.mxu0 %v174
    %530 = vmatmul.mubr.bf16.gmra.mrb[0].mxu0 %v173
    %v531 = vpop.f32.mrb[0].mxu0
    %v532 = vadd.f32 %v150, %v531
    %v533 = vpop.f32.mrb[0].mxu0
    %v534 = vadd.f32 %v154, %v533
    %v535 = vpop.f32.mrb[0].mxu0
    %v536 = vadd.f32 %v150, %v535
    %v537 = vpop.f32.mrb[0].mxu0
    %v538 = vadd.f32 %v154, %v537
    %539 = vdwg.mxu0
    %540 = vmatprep.subr.bf16.mxu0 %v372
    %541 = vmatpush1.bf16.msra.mxu0 %v371
    %542 = vmatprep.subr.bf16.mxu0 %v376
    %543 = vmatpush1.bf16.msra.mxu0 %v375
    %544 = vmatprep.subr.bf16.mxu0 %v380
    %545 = vmatpush1.bf16.msra.mxu0 %v379
    %546 = vmatprep.subr.bf16.mxu0 %v384
    %547 = vmatpush1.bf16.msra.mxu0 %v383
    %548 = vmatprep.subr.bf16.mxu0 %v388
    %549 = vmatpush1.bf16.msra.mxu0 %v387
    %550 = vmatprep.subr.bf16.mxu0 %v392
    %551 = vmatpush1.bf16.msra.mxu0 %v391
    %552 = vmatprep.subr.bf16.mxu0 %v396
    %553 = vmatpush1.bf16.msra.mxu0 %v395
    %554 = vmatprep.subr.bf16.mxu0 %v400
    %555 = vmatpush1.bf16.msra.mxu0 %v399
    %556 = vmatprep.subr.bf16.mxu0 %v404
    %557 = vmatpush1.bf16.msra.mxu0 %v403
    %558 = vmatprep.subr.bf16.mxu0 %v408
    %559 = vmatpush1.bf16.msra.mxu0 %v407
    %560 = vmatprep.subr.bf16.mxu0 %v412
    %561 = vmatpush1.bf16.msra.mxu0 %v411
    %562 = vmatprep.subr.bf16.mxu0 %v416
    %563 = vmatpush1.bf16.msra.mxu0 %v415
    %564 = vmatprep.subr.bf16.mxu0 %v420
    %565 = vmatpush1.bf16.msra.mxu0 %v419
    %566 = vmatprep.subr.bf16.mxu0 %v424
    %567 = vmatpush1.bf16.msra.mxu0 %v423
    %568 = vmatprep.subr.bf16.mxu0 %v428
    %569 = vmatpush1.bf16.msra.mxu0 %v427
    %570 = vmatprep.subr.bf16.mxu0 %v432
    %571 = vmatpush1.bf16.msra.mxu0 %v431
    %572 = vmatprep.mubr.bf16.mxu0 %v174
    %573 = vmatmul.mubr.bf16.gmra.mrb[0].mxu0 %v173
    %v574 = vpop.f32.mrb[0].mxu0
    %v575 = vadd.f32 %v158, %v574
    %v576 = vpop.f32.mrb[0].mxu0
    %v577 = vadd.f32 %v162, %v576
    %v578 = vpop.f32.mrb[0].mxu0
    %v579 = vadd.f32 %v158, %v578
    %v580 = vpop.f32.mrb[0].mxu0
    %v581 = vadd.f32 %v162, %v580
    %582 = vdwg.mxu0
    %v583 = vmax.f32 %v532, 0.0
    %v584 = vmax.f32 %v534, 0.0
    %v585 = vmax.f32 %v575, 0.0
    %v586 = vmax.f32 %v577, 0.0
    %v587 = vmax.f32 %v536, 0.0
    %v588 = vmax.f32 %v538, 0.0
    %v589 = vmax.f32 %v579, 0.0
    %v590 = vmax.f32 %v581, 0.0
    %v591 = vpack.c.bf16 %v587, %v583
    %v592 = vpack.c.bf16 %v588, %v584
    %v593 = vpack.c.bf16 %v589, %v585
    %v594 = vpack.c.bf16 %v590, %v586
    %v595 = vld [vmem:[#allocation7] sm:$0xff]
    %v596 = vld [vmem:[#allocation7 + $0x8] sm:$0xff]
    %v597 = vld [vmem:[#allocation7 + $0x10] sm:$0xf]
    %v598 = vld [vmem:[#allocation7 + $0x14] sm:$0xff]
    %v599 = vld [vmem:[#allocation7 + $0x1c] sm:$0xff]
    %v600 = vld [vmem:[#allocation7 + $0x24] sm:$0xf]
    %v601 = vld [vmem:[#allocation7 + $0x28] sm:$0xff]
    %v602 = vld [vmem:[#allocation7 + $0x30] sm:$0xff]
    %v603 = vld [vmem:[#allocation7 + $0x38] sm:$0xf]
    %v604 = vld [vmem:[#allocation7 + $0x3c] sm:$0xff]
    %v605 = vld [vmem:[#allocation7 + $0x44] sm:$0xff]
    %v606 = vld [vmem:[#allocation7 + $0x4c] sm:$0xf]
    %v607 = vld [vmem:[#allocation7 + $0x50] sm:$0xff]
    %v608 = vld [vmem:[#allocation7 + $0x58] sm:$0xff]
    %v609 = vld [vmem:[#allocation7 + $0x60] sm:$0xf]
    %v610 = vld [vmem:[#allocation7 + $0x64] sm:$0xff]
    %v611 = vld [vmem:[#allocation7 + $0x6c] sm:$0xff]
    %v612 = vld [vmem:[#allocation7 + $0x74] sm:$0xf]
    %v613 = vld [vmem:[#allocation7 + $0x78] sm:$0xff]
    %v614 = vld [vmem:[#allocation7 + $0x80] sm:$0xff]
    %v615 = vld [vmem:[#allocation7 + $0x88] sm:$0xf]
    %v616 = vld [vmem:[#allocation7 + $0x8c] sm:$0xff]
    %v617 = vld [vmem:[#allocation7 + $0x94] sm:$0xff]
    %v618 = vld [vmem:[#allocation7 + $0x9c] sm:$0xf]
    %v619 = vld [vmem:[#allocation7 + $0xa0] sm:$0xff]
    %v620 = vld [vmem:[#allocation7 + $0xa8] sm:$0xff]
    %v621 = vld [vmem:[#allocation7 + $0xb0] sm:$0xf]
    %v622 = vld [vmem:[#allocation7 + $0xb4] sm:$0xff]
    %v623 = vld [vmem:[#allocation7 + $0xbc] sm:$0xff]
    %v624 = vld [vmem:[#allocation7 + $0xc4] sm:$0xf]
    %v625 = vld [vmem:[#allocation7 + $0xc8] sm:$0xff]
    %v626 = vld [vmem:[#allocation7 + $0xd0] sm:$0xff]
    %v627 = vld [vmem:[#allocation7 + $0xd8] sm:$0xf]
    %v628 = vld [vmem:[#allocation7 + $0xdc] sm:$0xff]
    %v629 = vld [vmem:[#allocation7 + $0xe4] sm:$0xff]
    %v630 = vld [vmem:[#allocation7 + $0xec] sm:$0xf]
    %v631 = vld [vmem:[#allocation7 + $0xf0] sm:$0xff]
    %v632 = vld [vmem:[#allocation7 + $0xf8] sm:$0xff]
    %v633 = vld [vmem:[#allocation7 + $0x100] sm:$0xf]
    %v634 = vld [vmem:[#allocation7 + $0x104] sm:$0xff]
    %v635 = vld [vmem:[#allocation7 + $0x10c] sm:$0xff]
    %v636 = vld [vmem:[#allocation7 + $0x114] sm:$0xf]
    %v637 = vld [vmem:[#allocation7 + $0x118] sm:$0xff]
    %v638 = vld [vmem:[#allocation7 + $0x120] sm:$0xff]
    %v639 = vld [vmem:[#allocation7 + $0x128] sm:$0xf]
    %v640 = vld [vmem:[#allocation7 + $0x12c] sm:$0xff]
    %v641 = vld [vmem:[#allocation7 + $0x134] sm:$0xff]
    %v642 = vld [vmem:[#allocation7 + $0x13c] sm:$0xf]
    %v643 = vld [vmem:[#allocation7 + $0x140] sm:$0xff]
    %v644 = vld [vmem:[#allocation7 + $0x148] sm:$0xff]
    %v645 = vld [vmem:[#allocation7 + $0x150] sm:$0xf]
    %v646 = vld [vmem:[#allocation7 + $0x154] sm:$0xff]
    %v647 = vld [vmem:[#allocation7 + $0x15c] sm:$0xff]
    %v648 = vld [vmem:[#allocation7 + $0x164] sm:$0xf]
    %v649 = vld [vmem:[#allocation7 + $0x168] sm:$0xff]
    %v650 = vld [vmem:[#allocation7 + $0x170] sm:$0xff]
    %v651 = vld [vmem:[#allocation7 + $0x178] sm:$0xf]
    %v652 = vld [vmem:[#allocation7 + $0x17c] sm:$0xff]
    %v653 = vld [vmem:[#allocation7 + $0x184] sm:$0xff]
    %v654 = vld [vmem:[#allocation7 + $0x18c] sm:$0xf]
    %v655 = vld [vmem:[#allocation7 + $0x190] sm:$0xff]
    %v656 = vld [vmem:[#allocation7 + $0x198] sm:$0xff]
    %v657 = vld [vmem:[#allocation7 + $0x1a0] sm:$0xf]
    %v658 = vld [vmem:[#allocation7 + $0x1a4] sm:$0xff]
    %v659 = vld [vmem:[#allocation7 + $0x1ac] sm:$0xff]
    %v660 = vld [vmem:[#allocation7 + $0x1b4] sm:$0xf]
    %v661 = vld [vmem:[#allocation7 + $0x1b8] sm:$0xff]
    %v662 = vld [vmem:[#allocation7 + $0x1c0] sm:$0xff]
    %v663 = vld [vmem:[#allocation7 + $0x1c8] sm:$0xf]
    %v664 = vld [vmem:[#allocation7 + $0x1cc] sm:$0xff]
    %v665 = vld [vmem:[#allocation7 + $0x1d4] sm:$0xff]
    %v666 = vld [vmem:[#allocation7 + $0x1dc] sm:$0xf]
    %v667 = vld [vmem:[#allocation7 + $0x1e0] sm:$0xff]
    %v668 = vld [vmem:[#allocation7 + $0x1e8] sm:$0xff]
    %v669 = vld [vmem:[#allocation7 + $0x1f0] sm:$0xf]
    %v670 = vld [vmem:[#allocation7 + $0x1f4] sm:$0xff]
    %v671 = vld [vmem:[#allocation7 + $0x1fc] sm:$0xff]
    %v672 = vld [vmem:[#allocation7 + $0x204] sm:$0xf]
    %v673 = vld [vmem:[#allocation7 + $0x208] sm:$0xff]
    %v674 = vld [vmem:[#allocation7 + $0x210] sm:$0xff]
    %v675 = vld [vmem:[#allocation7 + $0x218] sm:$0xf]
    %v676 = vld [vmem:[#allocation7 + $0x21c] sm:$0xff]
    %v677 = vld [vmem:[#allocation7 + $0x224] sm:$0xff]
    %v678 = vld [vmem:[#allocation7 + $0x22c] sm:$0xf]
    %v679 = vld [vmem:[#allocation7 + $0x230] sm:$0xff]
    %v680 = vld [vmem:[#allocation7 + $0x238] sm:$0xff]
    %v681 = vld [vmem:[#allocation7 + $0x240] sm:$0xf]
    %v682 = vld [vmem:[#allocation7 + $0x244] sm:$0xff]
    %v683 = vld [vmem:[#allocation7 + $0x24c] sm:$0xff]
    %v684 = vld [vmem:[#allocation7 + $0x254] sm:$0xf]
    %v685 = vld [vmem:[#allocation7 + $0x258] sm:$0xff]
    %v686 = vld [vmem:[#allocation7 + $0x260] sm:$0xff]
    %v687 = vld [vmem:[#allocation7 + $0x268] sm:$0xf]
    %v688 = vld [vmem:[#allocation7 + $0x26c] sm:$0xff]
    %v689 = vld [vmem:[#allocation7 + $0x274] sm:$0xff]
    %v690 = vld [vmem:[#allocation7 + $0x27c] sm:$0xf]
    %v691 = vld [vmem:[#allocation7 + $0x280] sm:$0xff]
    %v692 = vld [vmem:[#allocation7 + $0x288] sm:$0xff]
    %v693 = vld [vmem:[#allocation7 + $0x290] sm:$0xf]
    %v694 = vld [vmem:[#allocation7 + $0x294] sm:$0xff]
    %v695 = vld [vmem:[#allocation7 + $0x29c] sm:$0xff]
    %v696 = vld [vmem:[#allocation7 + $0x2a4] sm:$0xf]
    %v697 = vld [vmem:[#allocation7 + $0x2a8] sm:$0xff]
    %v698 = vld [vmem:[#allocation7 + $0x2b0] sm:$0xff]
    %v699 = vld [vmem:[#allocation7 + $0x2b8] sm:$0xf]
    %v700 = vld [vmem:[#allocation7 + $0x2bc] sm:$0xff]
    %v701 = vld [vmem:[#allocation7 + $0x2c4] sm:$0xff]
    %v702 = vld [vmem:[#allocation7 + $0x2cc] sm:$0xf]
    %v703 = vld [vmem:[#allocation7 + $0x2d0] sm:$0xff]
    %v704 = vld [vmem:[#allocation7 + $0x2d8] sm:$0xff]
    %v705 = vld [vmem:[#allocation7 + $0x2e0] sm:$0xf]
    %v706 = vld [vmem:[#allocation7 + $0x2e4] sm:$0xff]
    %v707 = vld [vmem:[#allocation7 + $0x2ec] sm:$0xff]
    %v708 = vld [vmem:[#allocation7 + $0x2f4] sm:$0xf]
    %v709 = vld [vmem:[#allocation7 + $0x2f8] sm:$0xff]
    %v710 = vld [vmem:[#allocation7 + $0x300] sm:$0xff]
    %v711 = vld [vmem:[#allocation7 + $0x308] sm:$0xf]
    %v712 = vld [vmem:[#allocation7 + $0x30c] sm:$0xff]
    %v713 = vld [vmem:[#allocation7 + $0x314] sm:$0xff]
    %v714 = vld [vmem:[#allocation7 + $0x31c] sm:$0xf]
    %v715 = vld [vmem:[#allocation7 + $0x320] sm:$0xff]
    %v716 = vld [vmem:[#allocation7 + $0x328] sm:$0xff]
    %v717 = vld [vmem:[#allocation7 + $0x330] sm:$0xf]
    %v718 = vld [vmem:[#allocation7 + $0x334] sm:$0xff]
    %v719 = vld [vmem:[#allocation7 + $0x33c] sm:$0xff]
    %v720 = vld [vmem:[#allocation7 + $0x344] sm:$0xf]
    %v721 = vld [vmem:[#allocation7 + $0x348] sm:$0xff]
    %v722 = vld [vmem:[#allocation7 + $0x350] sm:$0xff]
    %v723 = vld [vmem:[#allocation7 + $0x358] sm:$0xf]
    %v724 = vld [vmem:[#allocation7 + $0x35c] sm:$0xff]
    %v725 = vld [vmem:[#allocation7 + $0x364] sm:$0xff]
    %v726 = vld [vmem:[#allocation7 + $0x36c] sm:$0xf]
    %v727 = vld [vmem:[#allocation7 + $0x370] sm:$0xff]
    %v728 = vld [vmem:[#allocation7 + $0x378] sm:$0xff]
    %v729 = vld [vmem:[#allocation7 + $0x380] sm:$0xf]
    %v730 = vld [vmem:[#allocation7 + $0x384] sm:$0xff]
    %v731 = vld [vmem:[#allocation7 + $0x38c] sm:$0xff]
    %v732 = vld [vmem:[#allocation7 + $0x394] sm:$0xf]
    %v733 = vld [vmem:[#allocation7 + $0x398] sm:$0xff]
    %v734 = vld [vmem:[#allocation7 + $0x3a0] sm:$0xff]
    %v735 = vld [vmem:[#allocation7 + $0x3a8] sm:$0xf]
    %v736 = vld [vmem:[#allocation7 + $0x3ac] sm:$0xff]
    %v737 = vld [vmem:[#allocation7 + $0x3b4] sm:$0xff]
    %v738 = vld [vmem:[#allocation7 + $0x3bc] sm:$0xf]
    %v739 = vld [vmem:[#allocation7 + $0x3c0] sm:$0xff]
    %v740 = vld [vmem:[#allocation7 + $0x3c8] sm:$0xff]
    %v741 = vld [vmem:[#allocation7 + $0x3d0] sm:$0xf]
    %v742 = vld [vmem:[#allocation7 + $0x3d4] sm:$0xff]
    %v743 = vld [vmem:[#allocation7 + $0x3dc] sm:$0xff]
    %v744 = vld [vmem:[#allocation7 + $0x3e4] sm:$0xf]
    %v745 = vld [vmem:[#allocation7 + $0x3e8] sm:$0xff]
    %v746 = vld [vmem:[#allocation7 + $0x3f0] sm:$0xff]
    %v747 = vld [vmem:[#allocation7 + $0x3f8] sm:$0xf]
    %v748 = vld [vmem:[#allocation7 + $0x3fc] sm:$0xff]
    %v749 = vld [vmem:[#allocation7 + $0x404] sm:$0xff]
    %v750 = vld [vmem:[#allocation7 + $0x40c] sm:$0xf]
    %v751 = vld [vmem:[#allocation7 + $0x410] sm:$0xff]
    %v752 = vld [vmem:[#allocation7 + $0x418] sm:$0xff]
    %v753 = vld [vmem:[#allocation7 + $0x420] sm:$0xf]
    %v754 = vld [vmem:[#allocation7 + $0x424] sm:$0xff]
    %v755 = vld [vmem:[#allocation7 + $0x42c] sm:$0xff]
    %v756 = vld [vmem:[#allocation7 + $0x434] sm:$0xf]
    %v757 = vld [vmem:[#allocation7 + $0x438] sm:$0xff]
    %v758 = vld [vmem:[#allocation7 + $0x440] sm:$0xff]
    %v759 = vld [vmem:[#allocation7 + $0x448] sm:$0xf]
    %v760 = vld [vmem:[#allocation7 + $0x44c] sm:$0xff]
    %v761 = vld [vmem:[#allocation7 + $0x454] sm:$0xff]
    %v762 = vld [vmem:[#allocation7 + $0x45c] sm:$0xf]
    %v763 = vld [vmem:[#allocation7 + $0x460] sm:$0xff]
    %v764 = vld [vmem:[#allocation7 + $0x468] sm:$0xff]
    %v765 = vld [vmem:[#allocation7 + $0x470] sm:$0xf]
    %v766 = vld [vmem:[#allocation7 + $0x474] sm:$0xff]
    %v767 = vld [vmem:[#allocation7 + $0x47c] sm:$0xff]
    %v768 = vld [vmem:[#allocation7 + $0x484] sm:$0xf]
    %v769 = vld [vmem:[#allocation7 + $0x488] sm:$0xff]
    %v770 = vld [vmem:[#allocation7 + $0x490] sm:$0xff]
    %v771 = vld [vmem:[#allocation7 + $0x498] sm:$0xf]
    %v772 = vld [vmem:[#allocation7 + $0x49c] sm:$0xff]
    %v773 = vld [vmem:[#allocation7 + $0x4a4] sm:$0xff]
    %v774 = vld [vmem:[#allocation7 + $0x4ac] sm:$0xf]
    %v775 = vld [vmem:[#allocation7 + $0x4b0] sm:$0xff]
    %v776 = vld [vmem:[#allocation7 + $0x4b8] sm:$0xff]
    %v777 = vld [vmem:[#allocation7 + $0x4c0] sm:$0xf]
    %v778 = vld [vmem:[#allocation7 + $0x4c4] sm:$0xff]
    %v779 = vld [vmem:[#allocation7 + $0x4cc] sm:$0xff]
    %v780 = vld [vmem:[#allocation7 + $0x4d4] sm:$0xf]
    %v781 = vld [vmem:[#allocation7 + $0x4d8] sm:$0xff]
    %v782 = vld [vmem:[#allocation7 + $0x4e0] sm:$0xff]
    %v783 = vld [vmem:[#allocation7 + $0x4e8] sm:$0xf]
    %v784 = vld [vmem:[#allocation7 + $0x4ec] sm:$0xff]
    %v785 = vld [vmem:[#allocation7 + $0x4f4] sm:$0xff]
    %v786 = vld [vmem:[#allocation7 + $0x4fc] sm:$0xf]
    %v979 = vunpack.c.l.b16 %v595
    %v980 = vunpack.c.h.b16 %v595
    %v981 = vunpack.c.l.b16 %v596
    %v982 = vunpack.c.h.b16 %v596
    %v983 = vunpack.c.l.b16 %v597
    %v984 = vunpack.c.l.b16 %v598
    %v985 = vunpack.c.h.b16 %v598
    %v986 = vunpack.c.l.b16 %v599
    %v987 = vunpack.c.h.b16 %v599
    %v988 = vunpack.c.l.b16 %v600
    %v989 = vunpack.c.l.b16 %v601
    %v990 = vunpack.c.h.b16 %v601
    %v991 = vunpack.c.l.b16 %v602
    %v992 = vunpack.c.h.b16 %v602
    %v993 = vunpack.c.l.b16 %v603
    %v994 = vunpack.c.l.b16 %v604
    %v995 = vunpack.c.h.b16 %v604
    %v996 = vunpack.c.l.b16 %v605
    %v997 = vunpack.c.h.b16 %v605
    %v998 = vunpack.c.l.b16 %v606
    %v999 = vunpack.c.l.b16 %v607
    %v1000 = vunpack.c.h.b16 %v607
    %v1001 = vunpack.c.l.b16 %v608
    %v1002 = vunpack.c.h.b16 %v608
    %v1003 = vunpack.c.l.b16 %v609
    %v1004 = vunpack.c.l.b16 %v610
    %v1005 = vunpack.c.h.b16 %v610
    %v1006 = vunpack.c.l.b16 %v611
    %v1007 = vunpack.c.h.b16 %v611
    %v1008 = vunpack.c.l.b16 %v612
    %v1009 = vunpack.c.l.b16 %v613
    %v1010 = vunpack.c.h.b16 %v613
    %v1011 = vunpack.c.l.b16 %v614
    %v1012 = vunpack.c.h.b16 %v614
    %v1013 = vunpack.c.l.b16 %v615
    %v1014 = vunpack.c.l.b16 %v616
    %v1015 = vunpack.c.h.b16 %v616
    %v1016 = vunpack.c.l.b16 %v617
    %v1017 = vunpack.c.h.b16 %v617
    %v1018 = vunpack.c.l.b16 %v618
    %v1019 = vunpack.c.l.b16 %v619
    %v1020 = vunpack.c.h.b16 %v619
    %v1021 = vunpack.c.l.b16 %v620
    %v1022 = vunpack.c.h.b16 %v620
    %v1023 = vunpack.c.l.b16 %v621
    %v1024 = vunpack.c.l.b16 %v622
    %v1025 = vunpack.c.h.b16 %v622
    %v1026 = vunpack.c.l.b16 %v623
    %v1027 = vunpack.c.h.b16 %v623
    %v1028 = vunpack.c.l.b16 %v624
    %v1029 = vunpack.c.l.b16 %v625
    %v1030 = vunpack.c.h.b16 %v625
    %v1031 = vunpack.c.l.b16 %v626
    %v1032 = vunpack.c.h.b16 %v626
    %v1033 = vunpack.c.l.b16 %v627
    %v1034 = vunpack.c.l.b16 %v628
    %v1035 = vunpack.c.h.b16 %v628
    %v1036 = vunpack.c.l.b16 %v629
    %v1037 = vunpack.c.h.b16 %v629
    %v1038 = vunpack.c.l.b16 %v630
    %v1039 = vunpack.c.l.b16 %v631
    %v1040 = vunpack.c.h.b16 %v631
    %v1041 = vunpack.c.l.b16 %v632
    %v1042 = vunpack.c.h.b16 %v632
    %v1043 = vunpack.c.l.b16 %v633
    %v1044 = vunpack.c.l.b16 %v634
    %v1045 = vunpack.c.h.b16 %v634
    %v1046 = vunpack.c.l.b16 %v635
    %v1047 = vunpack.c.h.b16 %v635
    %v1048 = vunpack.c.l.b16 %v636
    %v1049 = vunpack.c.l.b16 %v637
    %v1050 = vunpack.c.h.b16 %v637
    %v1051 = vunpack.c.l.b16 %v638
    %v1052 = vunpack.c.h.b16 %v638
    %v1053 = vunpack.c.l.b16 %v639
    %v1054 = vunpack.c.l.b16 %v640
    %v1055 = vunpack.c.h.b16 %v640
    %v1056 = vunpack.c.l.b16 %v641
    %v1057 = vunpack.c.h.b16 %v641
    %v1058 = vunpack.c.l.b16 %v642
    %v1059 = vunpack.c.l.b16 %v643
    %v1060 = vunpack.c.h.b16 %v643
    %v1061 = vunpack.c.l.b16 %v644
    %v1062 = vunpack.c.h.b16 %v644
    %v1063 = vunpack.c.l.b16 %v645
    %v1064 = vunpack.c.l.b16 %v646
    %v1065 = vunpack.c.h.b16 %v646
    %v1066 = vunpack.c.l.b16 %v647
    %v1067 = vunpack.c.h.b16 %v647
    %v1068 = vunpack.c.l.b16 %v648
    %v1069 = vunpack.c.l.b16 %v649
    %v1070 = vunpack.c.h.b16 %v649
    %v1071 = vunpack.c.l.b16 %v650
    %v1072 = vunpack.c.h.b16 %v650
    %v1073 = vunpack.c.l.b16 %v651
    %v1074 = vunpack.c.l.b16 %v652
    %v1075 = vunpack.c.h.b16 %v652
    %v1076 = vunpack.c.l.b16 %v653
    %v1077 = vunpack.c.h.b16 %v653
    %v1078 = vunpack.c.l.b16 %v654
    %v1079 = vunpack.c.l.b16 %v655
    %v1080 = vunpack.c.h.b16 %v655
    %v1081 = vunpack.c.l.b16 %v656
    %v1082 = vunpack.c.h.b16 %v656
    %v1083 = vunpack.c.l.b16 %v657
    %v1084 = vunpack.c.l.b16 %v658
    %v1085 = vunpack.c.h.b16 %v658
    %v1086 = vunpack.c.l.b16 %v659
    %v1087 = vunpack.c.h.b16 %v659
    %v1088 = vunpack.c.l.b16 %v660
    %v1089 = vunpack.c.l.b16 %v661
    %v1090 = vunpack.c.h.b16 %v661
    %v1091 = vunpack.c.l.b16 %v662
    %v1092 = vunpack.c.h.b16 %v662
    %v1093 = vunpack.c.l.b16 %v663
    %v1094 = vunpack.c.l.b16 %v664
    %v1095 = vunpack.c.h.b16 %v664
    %v1096 = vunpack.c.l.b16 %v665
    %v1097 = vunpack.c.h.b16 %v665
    %v1098 = vunpack.c.l.b16 %v666
    %v1099 = vunpack.c.l.b16 %v667
    %v1100 = vunpack.c.h.b16 %v667
    %v1101 = vunpack.c.l.b16 %v668
    %v1102 = vunpack.c.h.b16 %v668
    %v1103 = vunpack.c.l.b16 %v669
    %v1104 = vunpack.c.l.b16 %v670
    %v1105 = vunpack.c.h.b16 %v670
    %v1106 = vunpack.c.l.b16 %v671
    %v1107 = vunpack.c.h.b16 %v671
    %v1108 = vunpack.c.l.b16 %v672
    %v1109 = vunpack.c.l.b16 %v673
    %v1110 = vunpack.c.h.b16 %v673
    %v1111 = vunpack.c.l.b16 %v674
    %v1112 = vunpack.c.h.b16 %v674
    %v1113 = vunpack.c.l.b16 %v675
    %v1114 = vunpack.c.l.b16 %v676
    %v1115 = vunpack.c.h.b16 %v676
    %v1116 = vunpack.c.l.b16 %v677
    %v1117 = vunpack.c.h.b16 %v677
    %v1118 = vunpack.c.l.b16 %v678
    %v1119 = vunpack.c.l.b16 %v679
    %v1120 = vunpack.c.h.b16 %v679
    %v1121 = vunpack.c.l.b16 %v680
    %v1122 = vunpack.c.h.b16 %v680
    %v1123 = vunpack.c.l.b16 %v681
    %v1124 = vunpack.c.l.b16 %v682
    %v1125 = vunpack.c.h.b16 %v682
    %v1126 = vunpack.c.l.b16 %v683
    %v1127 = vunpack.c.h.b16 %v683
    %v1128 = vunpack.c.l.b16 %v684
    %v1129 = vunpack.c.l.b16 %v685
    %v1130 = vunpack.c.h.b16 %v685
    %v1131 = vunpack.c.l.b16 %v686
    %v1132 = vunpack.c.h.b16 %v686
    %v1133 = vunpack.c.l.b16 %v687
    %v1134 = vunpack.c.l.b16 %v688
    %v1135 = vunpack.c.h.b16 %v688
    %v1136 = vunpack.c.l.b16 %v689
    %v1137 = vunpack.c.h.b16 %v689
    %v1138 = vunpack.c.l.b16 %v690
    %v1139 = vunpack.c.l.b16 %v691
    %v1140 = vunpack.c.h.b16 %v691
    %v1141 = vunpack.c.l.b16 %v692
    %v1142 = vunpack.c.h.b16 %v692
    %v1143 = vunpack.c.l.b16 %v693
    %v1144 = vunpack.c.l.b16 %v694
    %v1145 = vunpack.c.h.b16 %v694
    %v1146 = vunpack.c.l.b16 %v695
    %v1147 = vunpack.c.h.b16 %v695
    %v1148 = vunpack.c.l.b16 %v696
    %v1149 = vunpack.c.l.b16 %v697
    %v1150 = vunpack.c.h.b16 %v697
    %v1151 = vunpack.c.l.b16 %v698
    %v1152 = vunpack.c.h.b16 %v698
    %v1153 = vunpack.c.l.b16 %v699
    %v1154 = vunpack.c.l.b16 %v700
    %v1155 = vunpack.c.h.b16 %v700
    %v1156 = vunpack.c.l.b16 %v701
    %v1157 = vunpack.c.h.b16 %v701
    %v1158 = vunpack.c.l.b16 %v702
    %v1159 = vunpack.c.l.b16 %v703
    %v1160 = vunpack.c.h.b16 %v703
    %v1161 = vunpack.c.l.b16 %v704
    %v1162 = vunpack.c.h.b16 %v704
    %v1163 = vunpack.c.l.b16 %v705
    %v1164 = vunpack.c.l.b16 %v706
    %v1165 = vunpack.c.h.b16 %v706
    %v1166 = vunpack.c.l.b16 %v707
    %v1167 = vunpack.c.h.b16 %v707
    %v1168 = vunpack.c.l.b16 %v708
    %v1169 = vunpack.c.l.b16 %v709
    %v1170 = vunpack.c.h.b16 %v709
    %v1171 = vunpack.c.l.b16 %v710
    %v1172 = vunpack.c.h.b16 %v710
    %v1173 = vunpack.c.l.b16 %v711
    %v1174 = vunpack.c.l.b16 %v712
    %v1175 = vunpack.c.h.b16 %v712
    %v1176 = vunpack.c.l.b16 %v713
    %v1177 = vunpack.c.h.b16 %v713
    %v1178 = vunpack.c.l.b16 %v714
    %v1179 = vunpack.c.l.b16 %v715
    %v1180 = vunpack.c.h.b16 %v715
    %v1181 = vunpack.c.l.b16 %v716
    %v1182 = vunpack.c.h.b16 %v716
    %v1183 = vunpack.c.l.b16 %v717
    %v1184 = vunpack.c.l.b16 %v718
    %v1185 = vunpack.c.h.b16 %v718
    %v1186 = vunpack.c.l.b16 %v719
    %v1187 = vunpack.c.h.b16 %v719
    %v1188 = vunpack.c.l.b16 %v720
    %v1189 = vunpack.c.l.b16 %v721
    %v1190 = vunpack.c.h.b16 %v721
    %v1191 = vunpack.c.l.b16 %v722
    %v1192 = vunpack.c.h.b16 %v722
    %v1193 = vunpack.c.l.b16 %v723
    %v1194 = vunpack.c.l.b16 %v724
    %v1195 = vunpack.c.h.b16 %v724
    %v1196 = vunpack.c.l.b16 %v725
    %v1197 = vunpack.c.h.b16 %v725
    %v1198 = vunpack.c.l.b16 %v726
    %v1199 = vunpack.c.l.b16 %v727
    %v1200 = vunpack.c.h.b16 %v727
    %v1201 = vunpack.c.l.b16 %v728
    %v1202 = vunpack.c.h.b16 %v728
    %v1203 = vunpack.c.l.b16 %v729
    %v1204 = vunpack.c.l.b16 %v730
    %v1205 = vunpack.c.h.b16 %v730
    %v1206 = vunpack.c.l.b16 %v731
    %v1207 = vunpack.c.h.b16 %v731
    %v1208 = vunpack.c.l.b16 %v732
    %v1209 = vunpack.c.l.b16 %v733
    %v1210 = vunpack.c.h.b16 %v733
    %v1211 = vunpack.c.l.b16 %v734
    %v1212 = vunpack.c.h.b16 %v734
    %v1213 = vunpack.c.l.b16 %v735
    %v1214 = vunpack.c.l.b16 %v736
    %v1215 = vunpack.c.h.b16 %v736
    %v1216 = vunpack.c.l.b16 %v737
    %v1217 = vunpack.c.h.b16 %v737
    %v1218 = vunpack.c.l.b16 %v738
    %v1219 = vunpack.c.l.b16 %v739
    %v1220 = vunpack.c.h.b16 %v739
    %v1221 = vunpack.c.l.b16 %v740
    %v1222 = vunpack.c.h.b16 %v740
    %v1223 = vunpack.c.l.b16 %v741
    %v1224 = vunpack.c.l.b16 %v742
    %v1225 = vunpack.c.h.b16 %v742
    %v1226 = vunpack.c.l.b16 %v743
    %v1227 = vunpack.c.h.b16 %v743
    %v1228 = vunpack.c.l.b16 %v744
    %v1229 = vunpack.c.l.b16 %v745
    %v1230 = vunpack.c.h.b16 %v745
    %v1231 = vunpack.c.l.b16 %v746
    %v1232 = vunpack.c.h.b16 %v746
    %v1233 = vunpack.c.l.b16 %v747
    %v1234 = vunpack.c.l.b16 %v748
    %v1235 = vunpack.c.h.b16 %v748
    %v1236 = vunpack.c.l.b16 %v749
    %v1237 = vunpack.c.h.b16 %v749
    %v1238 = vunpack.c.l.b16 %v750
    %v1239 = vunpack.c.l.b16 %v751
    %v1240 = vunpack.c.h.b16 %v751
    %v1241 = vunpack.c.l.b16 %v752
    %v1242 = vunpack.c.h.b16 %v752
    %v1243 = vunpack.c.l.b16 %v753
    %v1244 = vunpack.c.l.b16 %v754
    %v1245 = vunpack.c.h.b16 %v754
    %v1246 = vunpack.c.l.b16 %v755
    %v1247 = vunpack.c.h.b16 %v755
    %v1248 = vunpack.c.l.b16 %v756
    %v1249 = vunpack.c.l.b16 %v757
    %v1250 = vunpack.c.h.b16 %v757
    %v1251 = vunpack.c.l.b16 %v758
    %v1252 = vunpack.c.h.b16 %v758
    %v1253 = vunpack.c.l.b16 %v759
    %v1254 = vunpack.c.l.b16 %v760
    %v1255 = vunpack.c.h.b16 %v760
    %v1256 = vunpack.c.l.b16 %v761
    %v1257 = vunpack.c.h.b16 %v761
    %v1258 = vunpack.c.l.b16 %v762
    %v1259 = vunpack.c.l.b16 %v763
    %v1260 = vunpack.c.h.b16 %v763
    %v1261 = vunpack.c.l.b16 %v764
    %v1262 = vunpack.c.h.b16 %v764
    %v1263 = vunpack.c.l.b16 %v765
    %v1264 = vunpack.c.l.b16 %v766
    %v1265 = vunpack.c.h.b16 %v766
    %v1266 = vunpack.c.l.b16 %v767
    %v1267 = vunpack.c.h.b16 %v767
    %v1268 = vunpack.c.l.b16 %v768
    %v1269 = vunpack.c.l.b16 %v769
    %v1270 = vunpack.c.h.b16 %v769
    %v1271 = vunpack.c.l.b16 %v770
    %v1272 = vunpack.c.h.b16 %v770
    %v1273 = vunpack.c.l.b16 %v771
    %v1274 = vunpack.c.l.b16 %v772
    %v1275 = vunpack.c.h.b16 %v772
    %v1276 = vunpack.c.l.b16 %v773
    %v1277 = vunpack.c.h.b16 %v773
    %v1278 = vunpack.c.l.b16 %v774
    %v1279 = vunpack.c.l.b16 %v775
    %v1280 = vunpack.c.h.b16 %v775
    %v1281 = vunpack.c.l.b16 %v776
    %v1282 = vunpack.c.h.b16 %v776
    %v1283 = vunpack.c.l.b16 %v777
    %v1284 = vunpack.c.l.b16 %v778
    %v1285 = vunpack.c.h.b16 %v778
    %v1286 = vunpack.c.l.b16 %v779
    %v1287 = vunpack.c.h.b16 %v779
    %v1288 = vunpack.c.l.b16 %v780
    %v1289 = vunpack.c.l.b16 %v781
    %v1290 = vunpack.c.h.b16 %v781
    %v1291 = vunpack.c.l.b16 %v782
    %v1292 = vunpack.c.h.b16 %v782
    %v1293 = vunpack.c.l.b16 %v783
    %v1294 = vunpack.c.l.b16 %v784
    %v1295 = vunpack.c.h.b16 %v784
    %v1296 = vunpack.c.l.b16 %v785
    %v1297 = vunpack.c.h.b16 %v785
    %v1298 = vunpack.c.l.b16 %v786
    %v1299 = vpack.c.b16 %v984, %v979
    %v1300 = vpack.c.b16 %v985, %v980
    %v1301 = vpack.c.b16 %v986, %v981
    %v1302 = vpack.c.b16 %v987, %v982
    %v1303 = vpack.c.b16 %v988, %v983
    %v1304 = vpack.c.b16 %v994, %v989
    %v1305 = vpack.c.b16 %v995, %v990
    %v1306 = vpack.c.b16 %v996, %v991
    %v1307 = vpack.c.b16 %v997, %v992
    %v1308 = vpack.c.b16 %v998, %v993
    %v1309 = vpack.c.b16 %v1004, %v999
    %v1310 = vpack.c.b16 %v1005, %v1000
    %v1311 = vpack.c.b16 %v1006, %v1001
    %v1312 = vpack.c.b16 %v1007, %v1002
    %v1313 = vpack.c.b16 %v1008, %v1003
    %v1314 = vpack.c.b16 %v1014, %v1009
    %v1315 = vpack.c.b16 %v1015, %v1010
    %v1316 = vpack.c.b16 %v1016, %v1011
    %v1317 = vpack.c.b16 %v1017, %v1012
    %v1318 = vpack.c.b16 %v1018, %v1013
    %v1319 = vpack.c.b16 %v1024, %v1019
    %v1320 = vpack.c.b16 %v1025, %v1020
    %v1321 = vpack.c.b16 %v1026, %v1021
    %v1322 = vpack.c.b16 %v1027, %v1022
    %v1323 = vpack.c.b16 %v1028, %v1023
    %v1324 = vpack.c.b16 %v1034, %v1029
    %v1325 = vpack.c.b16 %v1035, %v1030
    %v1326 = vpack.c.b16 %v1036, %v1031
    %v1327 = vpack.c.b16 %v1037, %v1032
    %v1328 = vpack.c.b16 %v1038, %v1033
    %v1329 = vpack.c.b16 %v1044, %v1039
    %v1330 = vpack.c.b16 %v1045, %v1040
    %v1331 = vpack.c.b16 %v1046, %v1041
    %v1332 = vpack.c.b16 %v1047, %v1042
    %v1333 = vpack.c.b16 %v1048, %v1043
    %v1334 = vpack.c.b16 %v1054, %v1049
    %v1335 = vpack.c.b16 %v1055, %v1050
    %v1336 = vpack.c.b16 %v1056, %v1051
    %v1337 = vpack.c.b16 %v1057, %v1052
    %v1338 = vpack.c.b16 %v1058, %v1053
    %v1339 = vpack.c.b16 %v1064, %v1059
    %v1340 = vpack.c.b16 %v1065, %v1060
    %v1341 = vpack.c.b16 %v1066, %v1061
    %v1342 = vpack.c.b16 %v1067, %v1062
    %v1343 = vpack.c.b16 %v1068, %v1063
    %v1344 = vpack.c.b16 %v1074, %v1069
    %v1345 = vpack.c.b16 %v1075, %v1070
    %v1346 = vpack.c.b16 %v1076, %v1071
    %v1347 = vpack.c.b16 %v1077, %v1072
    %v1348 = vpack.c.b16 %v1078, %v1073
    %v1349 = vpack.c.b16 %v1084, %v1079
    %v1350 = vpack.c.b16 %v1085, %v1080
    %v1351 = vpack.c.b16 %v1086, %v1081
    %v1352 = vpack.c.b16 %v1087, %v1082
    %v1353 = vpack.c.b16 %v1088, %v1083
    %v1354 = vpack.c.b16 %v1094, %v1089
    %v1355 = vpack.c.b16 %v1095, %v1090
    %v1356 = vpack.c.b16 %v1096, %v1091
    %v1357 = vpack.c.b16 %v1097, %v1092
    %v1358 = vpack.c.b16 %v1098, %v1093
    %v1359 = vpack.c.b16 %v1104, %v1099
    %v1360 = vpack.c.b16 %v1105, %v1100
    %v1361 = vpack.c.b16 %v1106, %v1101
    %v1362 = vpack.c.b16 %v1107, %v1102
    %v1363 = vpack.c.b16 %v1108, %v1103
    %v1364 = vpack.c.b16 %v1114, %v1109
    %v1365 = vpack.c.b16 %v1115, %v1110
    %v1366 = vpack.c.b16 %v1116, %v1111
    %v1367 = vpack.c.b16 %v1117, %v1112
    %v1368 = vpack.c.b16 %v1118, %v1113
    %v1369 = vpack.c.b16 %v1124, %v1119
    %v1370 = vpack.c.b16 %v1125, %v1120
    %v1371 = vpack.c.b16 %v1126, %v1121
    %v1372 = vpack.c.b16 %v1127, %v1122
    %v1373 = vpack.c.b16 %v1128, %v1123
    %v1374 = vpack.c.b16 %v1134, %v1129
    %v1375 = vpack.c.b16 %v1135, %v1130
    %v1376 = vpack.c.b16 %v1136, %v1131
    %v1377 = vpack.c.b16 %v1137, %v1132
    %v1378 = vpack.c.b16 %v1138, %v1133
    %v1379 = vpack.c.b16 %v1144, %v1139
    %v1380 = vpack.c.b16 %v1145, %v1140
    %v1381 = vpack.c.b16 %v1146, %v1141
    %v1382 = vpack.c.b16 %v1147, %v1142
    %v1383 = vpack.c.b16 %v1148, %v1143
    %v1384 = vpack.c.b16 %v1154, %v1149
    %v1385 = vpack.c.b16 %v1155, %v1150
    %v1386 = vpack.c.b16 %v1156, %v1151
    %v1387 = vpack.c.b16 %v1157, %v1152
    %v1388 = vpack.c.b16 %v1158, %v1153
    %v1389 = vpack.c.b16 %v1164, %v1159
    %v1390 = vpack.c.b16 %v1165, %v1160
    %v1391 = vpack.c.b16 %v1166, %v1161
    %v1392 = vpack.c.b16 %v1167, %v1162
    %v1393 = vpack.c.b16 %v1168, %v1163
    %v1394 = vpack.c.b16 %v1174, %v1169
    %v1395 = vpack.c.b16 %v1175, %v1170
    %v1396 = vpack.c.b16 %v1176, %v1171
    %v1397 = vpack.c.b16 %v1177, %v1172
    %v1398 = vpack.c.b16 %v1178, %v1173
    %v1399 = vpack.c.b16 %v1184, %v1179
    %v1400 = vpack.c.b16 %v1185, %v1180
    %v1401 = vpack.c.b16 %v1186, %v1181
    %v1402 = vpack.c.b16 %v1187, %v1182
    %v1403 = vpack.c.b16 %v1188, %v1183
    %v1404 = vpack.c.b16 %v1194, %v1189
    %v1405 = vpack.c.b16 %v1195, %v1190
    %v1406 = vpack.c.b16 %v1196, %v1191
    %v1407 = vpack.c.b16 %v1197, %v1192
    %v1408 = vpack.c.b16 %v1198, %v1193
    %v1409 = vpack.c.b16 %v1204, %v1199
    %v1410 = vpack.c.b16 %v1205, %v1200
    %v1411 = vpack.c.b16 %v1206, %v1201
    %v1412 = vpack.c.b16 %v1207, %v1202
    %v1413 = vpack.c.b16 %v1208, %v1203
    %v1414 = vpack.c.b16 %v1214, %v1209
    %v1415 = vpack.c.b16 %v1215, %v1210
    %v1416 = vpack.c.b16 %v1216, %v1211
    %v1417 = vpack.c.b16 %v1217, %v1212
    %v1418 = vpack.c.b16 %v1218, %v1213
    %v1419 = vpack.c.b16 %v1224, %v1219
    %v1420 = vpack.c.b16 %v1225, %v1220
    %v1421 = vpack.c.b16 %v1226, %v1221
    %v1422 = vpack.c.b16 %v1227, %v1222
    %v1423 = vpack.c.b16 %v1228, %v1223
    %v1424 = vpack.c.b16 %v1234, %v1229
    %v1425 = vpack.c.b16 %v1235, %v1230
    %v1426 = vpack.c.b16 %v1236, %v1231
    %v1427 = vpack.c.b16 %v1237, %v1232
    %v1428 = vpack.c.b16 %v1238, %v1233
    %v1429 = vpack.c.b16 %v1244, %v1239
    %v1430 = vpack.c.b16 %v1245, %v1240
    %v1431 = vpack.c.b16 %v1246, %v1241
    %v1432 = vpack.c.b16 %v1247, %v1242
    %v1433 = vpack.c.b16 %v1248, %v1243
    %v1434 = vpack.c.b16 %v1254, %v1249
    %v1435 = vpack.c.b16 %v1255, %v1250
    %v1436 = vpack.c.b16 %v1256, %v1251
    %v1437 = vpack.c.b16 %v1257, %v1252
    %v1438 = vpack.c.b16 %v1258, %v1253
    %v1439 = vpack.c.b16 %v1264, %v1259
    %v1440 = vpack.c.b16 %v1265, %v1260
    %v1441 = vpack.c.b16 %v1266, %v1261
    %v1442 = vpack.c.b16 %v1267, %v1262
    %v1443 = vpack.c.b16 %v1268, %v1263
    %v1444 = vpack.c.b16 %v1274, %v1269
    %v1445 = vpack.c.b16 %v1275, %v1270
    %v1446 = vpack.c.b16 %v1276, %v1271
    %v1447 = vpack.c.b16 %v1277, %v1272
    %v1448 = vpack.c.b16 %v1278, %v1273
    %v1449 = vpack.c.b16 %v1284, %v1279
    %v1450 = vpack.c.b16 %v1285, %v1280
    %v1451 = vpack.c.b16 %v1286, %v1281
    %v1452 = vpack.c.b16 %v1287, %v1282
    %v1453 = vpack.c.b16 %v1288, %v1283
    %v1454 = vpack.c.b16 %v1294, %v1289
    %v1455 = vpack.c.b16 %v1295, %v1290
    %v1456 = vpack.c.b16 %v1296, %v1291
    %v1457 = vpack.c.b16 %v1297, %v1292
    %v1458 = vpack.c.b16 %v1298, %v1293
    %1619 = vmatprep.subr.bf16.mxu0 %v1300
    %1620 = vmatpush1.bf16.msra.mxu0 %v1299
    %1621 = vmatprep.subr.bf16.mxu0 %v1305
    %1622 = vmatpush1.bf16.msra.mxu0 %v1304
    %1623 = vmatprep.subr.bf16.mxu0 %v1310
    %1624 = vmatpush1.bf16.msra.mxu0 %v1309
    %1625 = vmatprep.subr.bf16.mxu0 %v1315
    %1626 = vmatpush1.bf16.msra.mxu0 %v1314
    %1627 = vmatprep.subr.bf16.mxu0 %v1320
    %1628 = vmatpush1.bf16.msra.mxu0 %v1319
    %1629 = vmatprep.subr.bf16.mxu0 %v1325
    %1630 = vmatpush1.bf16.msra.mxu0 %v1324
    %1631 = vmatprep.subr.bf16.mxu0 %v1330
    %1632 = vmatpush1.bf16.msra.mxu0 %v1329
    %1633 = vmatprep.subr.bf16.mxu0 %v1335
    %1634 = vmatpush1.bf16.msra.mxu0 %v1334
    %1635 = vmatprep.subr.bf16.mxu0 %v1340
    %1636 = vmatpush1.bf16.msra.mxu0 %v1339
    %1637 = vmatprep.subr.bf16.mxu0 %v1345
    %1638 = vmatpush1.bf16.msra.mxu0 %v1344
    %1639 = vmatprep.subr.bf16.mxu0 %v1350
    %1640 = vmatpush1.bf16.msra.mxu0 %v1349
    %1641 = vmatprep.subr.bf16.mxu0 %v1355
    %1642 = vmatpush1.bf16.msra.mxu0 %v1354
    %1643 = vmatprep.subr.bf16.mxu0 %v1360
    %1644 = vmatpush1.bf16.msra.mxu0 %v1359
    %1645 = vmatprep.subr.bf16.mxu0 %v1365
    %1646 = vmatpush1.bf16.msra.mxu0 %v1364
    %1647 = vmatprep.subr.bf16.mxu0 %v1370
    %1648 = vmatpush1.bf16.msra.mxu0 %v1369
    %1649 = vmatprep.subr.bf16.mxu0 %v1375
    %1650 = vmatpush1.bf16.msra.mxu0 %v1374
    %1651 = vmatprep.mubr.bf16.mxu0 %v592
    %1652 = vmatmul.mubr.bf16.gmra.mrb[0].mxu0 %v591
    %v1653 = vpop.f32.mrb[0].mxu0
    %v1654 = vadd.f32 0.0, %v1653
    %v1655 = vpop.f32.mrb[0].mxu0
    %v1656 = vadd.f32 0.0, %v1655
    %v1657 = vpop.f32.mrb[0].mxu0
    %v1658 = vadd.f32 0.0, %v1657
    %v1659 = vpop.f32.mrb[0].mxu0
    %v1660 = vadd.f32 0.0, %v1659
    %1661 = vdwg.mxu0
    %1662 = vmatprep.subr.bf16.mxu0 %v1380
    %1663 = vmatpush1.bf16.msra.mxu0 %v1379
    %1664 = vmatprep.subr.bf16.mxu0 %v1385
    %1665 = vmatpush1.bf16.msra.mxu0 %v1384
    %1666 = vmatprep.subr.bf16.mxu0 %v1390
    %1667 = vmatpush1.bf16.msra.mxu0 %v1389
    %1668 = vmatprep.subr.bf16.mxu0 %v1395
    %1669 = vmatpush1.bf16.msra.mxu0 %v1394
    %1670 = vmatprep.subr.bf16.mxu0 %v1400
    %1671 = vmatpush1.bf16.msra.mxu0 %v1399
    %1672 = vmatprep.subr.bf16.mxu0 %v1405
    %1673 = vmatpush1.bf16.msra.mxu0 %v1404
    %1674 = vmatprep.subr.bf16.mxu0 %v1410
    %1675 = vmatpush1.bf16.msra.mxu0 %v1409
    %1676 = vmatprep.subr.bf16.mxu0 %v1415
    %1677 = vmatpush1.bf16.msra.mxu0 %v1414
    %1678 = vmatprep.subr.bf16.mxu0 %v1420
    %1679 = vmatpush1.bf16.msra.mxu0 %v1419
    %1680 = vmatprep.subr.bf16.mxu0 %v1425
    %1681 = vmatpush1.bf16.msra.mxu0 %v1424
    %1682 = vmatprep.subr.bf16.mxu0 %v1430
    %1683 = vmatpush1.bf16.msra.mxu0 %v1429
    %1684 = vmatprep.subr.bf16.mxu0 %v1435
    %1685 = vmatpush1.bf16.msra.mxu0 %v1434
    %1686 = vmatprep.subr.bf16.mxu0 %v1440
    %1687 = vmatpush1.bf16.msra.mxu0 %v1439
    %1688 = vmatprep.subr.bf16.mxu0 %v1445
    %1689 = vmatpush1.bf16.msra.mxu0 %v1444
    %1690 = vmatprep.subr.bf16.mxu0 %v1450
    %1691 = vmatpush1.bf16.msra.mxu0 %v1449
    %1692 = vmatprep.subr.bf16.mxu0 %v1455
    %1693 = vmatpush1.bf16.msra.mxu0 %v1454
    %1694 = vmatprep.mubr.bf16.mxu0 %v594
    %1695 = vmatmul.mubr.bf16.gmra.mrb[0].mxu0 %v593
    %v1696 = vpop.f32.mrb[0].mxu0
    %v1697 = vadd.f32 %v1654, %v1696
    %v1698 = vpop.f32.mrb[0].mxu0
    %v1699 = vadd.f32 %v1656, %v1698
    %v1700 = vpop.f32.mrb[0].mxu0
    %v1701 = vadd.f32 %v1658, %v1700
    %v1702 = vpop.f32.mrb[0].mxu0
    %v1703 = vadd.f32 %v1660, %v1702
    %1704 = vdwg.mxu0
    %1705 = vmatprep.subr.bf16.mxu0 %v1302
    %1706 = vmatpush1.bf16.msra.mxu0 %v1301
    %1707 = vmatprep.subr.bf16.mxu0 %v1307
    %1708 = vmatpush1.bf16.msra.mxu0 %v1306
    %1709 = vmatprep.subr.bf16.mxu0 %v1312
    %1710 = vmatpush1.bf16.msra.mxu0 %v1311
    %1711 = vmatprep.subr.bf16.mxu0 %v1317
    %1712 = vmatpush1.bf16.msra.mxu0 %v1316
    %1713 = vmatprep.subr.bf16.mxu0 %v1322
    %1714 = vmatpush1.bf16.msra.mxu0 %v1321
    %1715 = vmatprep.subr.bf16.mxu0 %v1327
    %1716 = vmatpush1.bf16.msra.mxu0 %v1326
    %1717 = vmatprep.subr.bf16.mxu0 %v1332
    %1718 = vmatpush1.bf16.msra.mxu0 %v1331
    %1719 = vmatprep.subr.bf16.mxu0 %v1337
    %1720 = vmatpush1.bf16.msra.mxu0 %v1336
    %1721 = vmatprep.subr.bf16.mxu0 %v1342
    %1722 = vmatpush1.bf16.msra.mxu0 %v1341
    %1723 = vmatprep.subr.bf16.mxu0 %v1347
    %1724 = vmatpush1.bf16.msra.mxu0 %v1346
    %1725 = vmatprep.subr.bf16.mxu0 %v1352
    %1726 = vmatpush1.bf16.msra.mxu0 %v1351
    %1727 = vmatprep.subr.bf16.mxu0 %v1357
    %1728 = vmatpush1.bf16.msra.mxu0 %v1356
    %1729 = vmatprep.subr.bf16.mxu0 %v1362
    %1730 = vmatpush1.bf16.msra.mxu0 %v1361
    %1731 = vmatprep.subr.bf16.mxu0 %v1367
    %1732 = vmatpush1.bf16.msra.mxu0 %v1366
    %1733 = vmatprep.subr.bf16.mxu0 %v1372
    %1734 = vmatpush1.bf16.msra.mxu0 %v1371
    %1735 = vmatprep.subr.bf16.mxu0 %v1377
    %1736 = vmatpush1.bf16.msra.mxu0 %v1376
    %1737 = vmatprep.mubr.bf16.mxu0 %v592
    %1738 = vmatmul.mubr.bf16.gmra.mrb[0].mxu0 %v591
    %v1739 = vpop.f32.mrb[0].mxu0
    %v1740 = vadd.f32 0.0, %v1739
    %v1741 = vpop.f32.mrb[0].mxu0
    %v1742 = vadd.f32 0.0, %v1741
    %v1743 = vpop.f32.mrb[0].mxu0
    %v1744 = vadd.f32 0.0, %v1743
    %v1745 = vpop.f32.mrb[0].mxu0
    %v1746 = vadd.f32 0.0, %v1745
    %1747 = vdwg.mxu0
    %1748 = vmatprep.subr.bf16.mxu0 %v1382
    %1749 = vmatpush1.bf16.msra.mxu0 %v1381
    %1750 = vmatprep.subr.bf16.mxu0 %v1387
    %1751 = vmatpush1.bf16.msra.mxu0 %v1386
    %1752 = vmatprep.subr.bf16.mxu0 %v1392
    %1753 = vmatpush1.bf16.msra.mxu0 %v1391
    %1754 = vmatprep.subr.bf16.mxu0 %v1397
    %1755 = vmatpush1.bf16.msra.mxu0 %v1396
    %1756 = vmatprep.subr.bf16.mxu0 %v1402
    %1757 = vmatpush1.bf16.msra.mxu0 %v1401
    %1758 = vmatprep.subr.bf16.mxu0 %v1407
    %1759 = vmatpush1.bf16.msra.mxu0 %v1406
    %1760 = vmatprep.subr.bf16.mxu0 %v1412
    %1761 = vmatpush1.bf16.msra.mxu0 %v1411
    %1762 = vmatprep.subr.bf16.mxu0 %v1417
    %1763 = vmatpush1.bf16.msra.mxu0 %v1416
    %1764 = vmatprep.subr.bf16.mxu0 %v1422
    %1765 = vmatpush1.bf16.msra.mxu0 %v1421
    %1766 = vmatprep.subr.bf16.mxu0 %v1427
    %1767 = vmatpush1.bf16.msra.mxu0 %v1426
    %1768 = vmatprep.subr.bf16.mxu0 %v1432
    %1769 = vmatpush1.bf16.msra.mxu0 %v1431
    %1770 = vmatprep.subr.bf16.mxu0 %v1437
    %1771 = vmatpush1.bf16.msra.mxu0 %v1436
    %1772 = vmatprep.subr.bf16.mxu0 %v1442
    %1773 = vmatpush1.bf16.msra.mxu0 %v1441
    %1774 = vmatprep.subr.bf16.mxu0 %v1447
    %1775 = vmatpush1.bf16.msra.mxu0 %v1446
    %1776 = vmatprep.subr.bf16.mxu0 %v1452
    %1777 = vmatpush1.bf16.msra.mxu0 %v1451
    %1778 = vmatprep.subr.bf16.mxu0 %v1457
    %1779 = vmatpush1.bf16.msra.mxu0 %v1456
    %1780 = vmatprep.mubr.bf16.mxu0 %v594
    %1781 = vmatmul.mubr.bf16.gmra.mrb[0].mxu0 %v593
    %v1782 = vpop.f32.mrb[0].mxu0
    %v1783 = vadd.f32 %v1740, %v1782
    %v1784 = vpop.f32.mrb[0].mxu0
    %v1785 = vadd.f32 %v1742, %v1784
    %v1786 = vpop.f32.mrb[0].mxu0
    %v1787 = vadd.f32 %v1744, %v1786
    %v1788 = vpop.f32.mrb[0].mxu0
    %v1789 = vadd.f32 %v1746, %v1788
    %1790 = vdwg.mxu0
    %1791 = vmatprep.subr.bf16.mxu0 0
    %1792 = vmatpush1.bf16.msra.mxu0 %v1303
    %1793 = vmatprep.subr.bf16.mxu0 0
    %1794 = vmatpush1.bf16.msra.mxu0 %v1308
    %1795 = vmatprep.subr.bf16.mxu0 0
    %1796 = vmatpush1.bf16.msra.mxu0 %v1313
    %1797 = vmatprep.subr.bf16.mxu0 0
    %1798 = vmatpush1.bf16.msra.mxu0 %v1318
    %1799 = vmatprep.subr.bf16.mxu0 0
    %1800 = vmatpush1.bf16.msra.mxu0 %v1323
    %1801 = vmatprep.subr.bf16.mxu0 0
    %1802 = vmatpush1.bf16.msra.mxu0 %v1328
    %1803 = vmatprep.subr.bf16.mxu0 0
    %1804 = vmatpush1.bf16.msra.mxu0 %v1333
    %1805 = vmatprep.subr.bf16.mxu0 0
    %1806 = vmatpush1.bf16.msra.mxu0 %v1338
    %1807 = vmatprep.subr.bf16.mxu0 0
    %1808 = vmatpush1.bf16.msra.mxu0 %v1343
    %1809 = vmatprep.subr.bf16.mxu0 0
    %1810 = vmatpush1.bf16.msra.mxu0 %v1348
    %1811 = vmatprep.subr.bf16.mxu0 0
    %1812 = vmatpush1.bf16.msra.mxu0 %v1353
    %1813 = vmatprep.subr.bf16.mxu0 0
    %1814 = vmatpush1.bf16.msra.mxu0 %v1358
    %1815 = vmatprep.subr.bf16.mxu0 0
    %1816 = vmatpush1.bf16.msra.mxu0 %v1363
    %1817 = vmatprep.subr.bf16.mxu0 0
    %1818 = vmatpush1.bf16.msra.mxu0 %v1368
    %1819 = vmatprep.subr.bf16.mxu0 0
    %1820 = vmatpush1.bf16.msra.mxu0 %v1373
    %1821 = vmatprep.subr.bf16.mxu0 0
    %1822 = vmatpush1.bf16.msra.mxu0 %v1378
    %1823 = vmatprep.mubr.bf16.mxu0 %v592
    %1824 = vmatmul.mubr.bf16.gmra.mrb[0].mxu0 %v591
    %v1825 = vpop.f32.mrb[0].mxu0
    %v1826 = vadd.f32 0.0, %v1825
    %v1827 = vpop.f32.mrb[0].mxu0
    %v1828 = vpop.f32.mrb[0].mxu0
    %v1829 = vadd.f32 0.0, %v1828
    %v1830 = vpop.f32.mrb[0].mxu0
    %1831 = vdwg.mxu0
    %1832 = vmatprep.subr.bf16.mxu0 0
    %1833 = vmatpush1.bf16.msra.mxu0 %v1383
    %1834 = vmatprep.subr.bf16.mxu0 0
    %1835 = vmatpush1.bf16.msra.mxu0 %v1388
    %1836 = vmatprep.subr.bf16.mxu0 0
    %1837 = vmatpush1.bf16.msra.mxu0 %v1393
    %1838 = vmatprep.subr.bf16.mxu0 0
    %1839 = vmatpush1.bf16.msra.mxu0 %v1398
    %1840 = vmatprep.subr.bf16.mxu0 0
    %1841 = vmatpush1.bf16.msra.mxu0 %v1403
    %1842 = vmatprep.subr.bf16.mxu0 0
    %1843 = vmatpush1.bf16.msra.mxu0 %v1408
    %1844 = vmatprep.subr.bf16.mxu0 0
    %1845 = vmatpush1.bf16.msra.mxu0 %v1413
    %1846 = vmatprep.subr.bf16.mxu0 0
    %1847 = vmatpush1.bf16.msra.mxu0 %v1418
    %1848 = vmatprep.subr.bf16.mxu0 0
    %1849 = vmatpush1.bf16.msra.mxu0 %v1423
    %1850 = vmatprep.subr.bf16.mxu0 0
    %1851 = vmatpush1.bf16.msra.mxu0 %v1428
    %1852 = vmatprep.subr.bf16.mxu0 0
    %1853 = vmatpush1.bf16.msra.mxu0 %v1433
    %1854 = vmatprep.subr.bf16.mxu0 0
    %1855 = vmatpush1.bf16.msra.mxu0 %v1438
    %1856 = vmatprep.subr.bf16.mxu0 0
    %1857 = vmatpush1.bf16.msra.mxu0 %v1443
    %1858 = vmatprep.subr.bf16.mxu0 0
    %1859 = vmatpush1.bf16.msra.mxu0 %v1448
    %1860 = vmatprep.subr.bf16.mxu0 0
    %1861 = vmatpush1.bf16.msra.mxu0 %v1453
    %1862 = vmatprep.subr.bf16.mxu0 0
    %1863 = vmatpush1.bf16.msra.mxu0 %v1458
    %1864 = vmatprep.mubr.bf16.mxu0 %v594
    %1865 = vmatmul.mubr.bf16.gmra.mrb[0].mxu0 %v593
    %v1866 = vpop.f32.mrb[0].mxu0
    %v1867 = vadd.f32 %v1826, %v1866
    %v1868 = vpop.f32.mrb[0].mxu0
    %v1869 = vpop.f32.mrb[0].mxu0
    %v1870 = vadd.f32 %v1829, %v1869
    %v1871 = vpop.f32.mrb[0].mxu0
    %1872 = vdwg.mxu0
    %v1874 = vlaneseq
    %v1875 = vshrl.u32 %v1874, 7
    %v1876 = vsub.s32 0, %v1875
    %v1877 = vrot.slane %v74, %v1876
    %v1878 = vlaneseq
    %v1879 = vshrl.u32 %v1878, 7
    %v1880 = vsub.s32 1, %v1879
    %v1881 = vrot.slane %v74, %v1880
    %v1884 = vadd.f32 %v1697, %v1877
    %v1885 = vadd.f32 %v1699, %v1881
    %v1886 = vadd.f32 %v1701, %v1877
    %v1887 = vadd.f32 %v1703, %v1881
    %v1888 = vtanh.pop %v1884
    %v1889 = vtanh.pop %v1885
    %v1890 = vtanh.pop %v1886
    %v1891 = vtanh.pop %v1887
    %v1893 = vlaneseq
    %v1894 = vshrl.u32 %v1893, 7
    %v1895 = vsub.s32 0, %v1894
    %v1896 = vrot.slane %v76, %v1895
    %v1897 = vlaneseq
    %v1898 = vshrl.u32 %v1897, 7
    %v1899 = vsub.s32 1, %v1898
    %v1900 = vrot.slane %v76, %v1899
    %v1903 = vadd.f32 %v1783, %v1896
    %v1904 = vadd.f32 %v1785, %v1900
    %v1905 = vadd.f32 %v1787, %v1896
    %v1906 = vadd.f32 %v1789, %v1900
    %v1907 = vxor.u32 %v1903, 2147483648
    %v1908 = vxor.u32 %v1904, 2147483648
    %v1909 = vxor.u32 %v1905, 2147483648
    %v1910 = vxor.u32 %v1906, 2147483648
    %v1911 = vmul.f32 %v1907, 1.442695
    %v1912 = vpow.pop %v1911
    %v1913 = vmul.f32 %v1908, 1.442695
    %v1914 = vpow.pop %v1913
    %v1915 = vmul.f32 %v1909, 1.442695
    %v1916 = vpow.pop %v1915
    %v1917 = vmul.f32 %v1910, 1.442695
    %v1918 = vpow.pop %v1917
    %v1919 = vadd.f32 %v1912, 1.0
    %v1920 = vadd.f32 %v1914, 1.0
    %v1921 = vadd.f32 %v1916, 1.0
    %v1922 = vadd.f32 %v1918, 1.0
    %v1923 = vrcp.pop %v1919
    %v1924 = vmul.f32 1.0, %v1923
    %v1925 = vrcp.pop %v1920
    %v1926 = vmul.f32 1.0, %v1925
    %v1927 = vrcp.pop %v1921
    %v1928 = vmul.f32 1.0, %v1927
    %v1929 = vrcp.pop %v1922
    %v1930 = vmul.f32 1.0, %v1929
    %v1931 = vmul.f32 %v1888, %v1924
    %v1932 = vmul.f32 %v1889, %v1926
    %v1933 = vmul.f32 %v1890, %v1928
    %v1934 = vmul.f32 %v1891, %v1930
    %v1936 = vlaneseq
    %v1937 = vshrl.u32 %v1936, 7
    %v1938 = vsub.s32 0, %v1937
    %v1939 = vrot.slane %v78, %v1938
    %v1940 = vlaneseq
    %v1941 = vshrl.u32 %v1940, 7
    %v1942 = vsub.s32 1, %v1941
    %v1943 = vrot.slane %v78, %v1942
    %v1946 = vmul.f32 %v1931, %v1939
    %v1947 = vmul.f32 %v1932, %v1943
    %v1948 = vmul.f32 %v1933, %v1939
    %v1949 = vmul.f32 %v1934, %v1943
    %v1950 = vadd.f32 %v1946, %v1947
    %1951 = vadd.xlane.f32.xlu0 %v1950
    %v1952 = vpop.xlane.xlu0 %1951
    %v1953 = vadd.f32 %v1948, %v1949
    %1954 = vadd.xlane.f32.xlu0 %v1953
    %v1955 = vpop.xlane.xlu0 %1954
    %v1956 = vlaneseq
    %v1957 = vshrl.u32 %v1956, 7
    %v1958 = vsub.s32 0, %v1957
    %v1959 = vrot.slane %v79, %v1958
    %v1960 = vadd.f32 %v1952, %v1959
    %v1961 = vadd.f32 %v1955, %v1959
    %v1962 = vadd.f32 %v1867, %v1959
    %v1963 = vadd.f32 %v1870, %v1959
    %vm1964 = vcmask 39968
    %v1965 = vsel %vm1964, %v1960, -inf
    %v1966 = vrot.slane %v1965, 4
    %v1967 = vmax.f32 %v1965, %v1966
    %v1968 = vrot.slane %v1967, 2
    %v1969 = vmax.f32 %v1967, %v1968
    %v1970 = vrot.slane %v1969, 1
    %v1971 = vmax.f32 %v1969, %v1970
    %v1972 = vsub.f32 %v1960, %v1971
    %v1973 = vmul.f32 %v1972, 1.442695
    %v1974 = vpow.pop %v1973
    %v1975 = vsel %vm1964, %v1974, 0.0
    %v1976 = vrot.slane %v1975, 4
    %v1977 = vadd.f32 %v1975, %v1976
    %v1978 = vrot.slane %v1977, 2
    %v1979 = vadd.f32 %v1977, %v1978
    %v1980 = vrot.slane %v1979, 1
    %v1981 = vadd.f32 %v1979, %v1980
    %v1982 = vrcp.pop %v1981
    %v1983 = vmul.f32 %v1974, %v1982
    %1985 = vset.pattern.permute.xlu0 4
    %1986 = vperm.xlu0 %1985, %v1983
    %v1987 = vpop.permute.xlu0 %1986
    %v1989 = vmul.f32 %v1987, %v1962
    %vm1990 = vcmask 15360
    %v1991 = vsel %vm1990, %v1989, 0.0
    %v1992 = vrot.slane %v1991, 4
    %v1993 = vadd.f32 %v1991, %v1992
    %v1994 = vrot.slane %v1993, 2
    %v1995 = vadd.f32 %v1993, %v1994
    %v1996 = vrot.slane %v1995, 1
    %v1997 = vadd.f32 %v1995, %v1996
    %v1998 = vsel %vm1964, %v1961, -inf
    %v1999 = vrot.slane %v1998, 4
    %v2000 = vmax.f32 %v1998, %v1999
    %v2001 = vrot.slane %v2000, 2
    %v2002 = vmax.f32 %v2000, %v2001
    %v2003 = vrot.slane %v2002, 1
    %v2004 = vmax.f32 %v2002, %v2003
    %v2005 = vsub.f32 %v1961, %v2004
    %v2006 = vmul.f32 %v2005, 1.442695
    %v2007 = vpow.pop %v2006
    %v2008 = vsel %vm1964, %v2007, 0.0
    %v2009 = vrot.slane %v2008, 4
    %v2010 = vadd.f32 %v2008, %v2009
    %v2011 = vrot.slane %v2010, 2
    %v2012 = vadd.f32 %v2010, %v2011
    %v2013 = vrot.slane %v2012, 1
    %v2014 = vadd.f32 %v2012, %v2013
    %v2015 = vrcp.pop %v2014
    %v2016 = vmul.f32 %v2007, %v2015
    %2018 = vset.pattern.permute.xlu0 4
    %2019 = vperm.xlu0 %2018, %v2016
    %v2020 = vpop.permute.xlu0 %2019
    %v2022 = vmul.f32 %v2020, %v1963
    %v2023 = vsel %vm1990, %v2022, 0.0
    %v2024 = vrot.slane %v2023, 4
    %v2025 = vadd.f32 %v2023, %v2024
    %v2026 = vrot.slane %v2025, 2
    %v2027 = vadd.f32 %v2025, %v2026
    %v2028 = vrot.slane %v2027, 1
    %v2029 = vadd.f32 %v2027, %v2028
    %2032 = vrot.lane.b32.xlu0 %v1962, 126
    %v2033 = vpop.permute.xlu0 %2032
    %2034 = vrot.lane.b32.xlu0 %v1963, 126
    %v2035 = vpop.permute.xlu0 %2034
    %2040 = vrot.lane.b32.xlu0 %v1960, 126
    %v2041 = vpop.permute.xlu0 %2040
    %2042 = vrot.lane.b32.xlu0 %v1961, 126
    %v2043 = vpop.permute.xlu0 %2042
    %2048 = vrot.lane.b32.xlu0 %v1997, 3
    %v2049 = vpop.permute.xlu0 %2048
    %2050 = vrot.lane.b32.xlu0 %v2029, 3
    %v2051 = vpop.permute.xlu0 %2050
    %v2054 = vsel %vm1990, %v2033, %v2041
    %v2055 = vsel %vm1990, %v2035, %v2043
    %vm2056 = vcmask 23552
    %v2057 = vsel %vm2056, %v2054, %v2049
    %v2058 = vsel %vm2056, %v2055, %v2051
    %vm2059 = vcmask 39936
    %v2060 = vsel %vm2059, %v2057, 0.0
    %v2061 = vsel %vm2059, %v2058, 0.0
    %2062 = vst [vmem:[#allocation10] sm:$0xff] %v2060
    %2063 = vst [vmem:[#allocation10 + $0x8] sm:$0xff] %v2061
    // Predicated region
    $region34: #{tpu_custom_call.1} parent=1 // pred_check
      _
    $region35: #{tpu_custom_call.1} parent=1 // pred_check_branch
      %2065 = sbr.rel (0) target = $region37
    $region36: #{tpu_custom_call.1} parent=1 // pred_region
      %s2067 = ssub.s32 256, 256
      %2068 = vsyncadd [#allocation4], %s2067
      %s2069 = sshll.u32 [#allocation10], 4
      %s2070 = int_to_ptr.vmem [resolvable:$true] %s2069
      %2075 = dma.vmem_to_hbm [thread:$0]  %s2070, 256, %s4, [#allocation4], 128, 128, 8
    $region37: #{tpu_custom_call.1} parent=1 // pred_fallthru
      _
    // Predicated region
    $region38: #{tpu_custom_call.1} parent=1 // pred_check
      _
    $region39: #{tpu_custom_call.1} parent=1 // pred_check_branch
      %2077 = sbr.rel (0) target = $region41
    $region40: #{tpu_custom_call.1} parent=1 // pred_region
      %2078 = dma.done [#allocation4], 256
    $region41: #{tpu_custom_call.1} parent=1 // pred_fallthru
      _
    %2079 = vsyncpa [#allocation3], 1
    %2080 = vsyncpa [#allocation6], 1
    %2081 = vsyncpa [#allocation9], 1
    %2082 = vsyncpa [#allocation4], 1

</llo_original>
